<compile_context>
chip_gen: v6e
topology: v6e:2x2x1
jax: 0.10.0
libtpu: 0.0.40
codegen_flags: <defaults>
</compile_context>

<pallas_src>
import jax
import jax.numpy as jnp
from jax.experimental import pallas as pl
from jax.experimental.pallas import tpu as pltpu


def _make_vq_kernel(num_embeddings, emb_dim, tile_l, seq_len,
                    tiles_per_chunk, num_chunks, needs_mask):
    K = num_embeddings
    D = emb_dim
    use_folded = (tile_l % 128 == 0)
    n_lane_chunks = tile_l // 128 if use_folded else 1

    def vq_kernel(x_ref, emb_ref, embt_ref, hesq_ref,
                  q_ref, idx_ref, ploss_ref, pcnt_ref,
                  loss_acc, cnt_acc):
        c = pl.program_id(1)
        l = pl.program_id(2)

        # Zero the per-(batch, chunk) VMEM accumulators at the start of each
        # reduction run over the inner (arbitrary) L axis.
        @pl.when(l == 0)
        def _():
            loss_acc[...] = jnp.zeros_like(loss_acc)
            cnt_acc[...] = jnp.zeros_like(cnt_acc)

        x = x_ref[0].astype(jnp.float32)            # (D, TILE_L)  NCL slab
        e = emb_ref[...].astype(jnp.float32)        # (K, D)       codebook
        e_t = embt_ref[...].astype(jnp.float32)     # (D, K)       codebook^T
        half_e_sq = hesq_ref[...]                   # (K, 1)       0.5*||e||^2

        # argmin_k ||x - e_k||^2 == argmin_k (0.5*||e_k||^2 - e_k . x)
        # Kept in f32 on purpose: the D=32 / K=64 matmuls are nowhere near the
        # bottleneck and f32 avoids bf16 tie-break drift in the argmin.
        scores = jnp.dot(e, x, preferred_element_type=jnp.float32)   # (K, T)
        dist = half_e_sq - scores                                    # (K, T)
        min_d = jnp.min(dist, axis=0, keepdims=True)                 # (1, T)
        row = jax.lax.broadcasted_iota(jnp.int32, dist.shape, 0)     # (K, T)
        idx = jnp.min(jnp.where(dist <= min_d, row, K), axis=0,
                      keepdims=True)                                 # (1, T)
        idx_ref[0] = idx

        # One-hot stays in VMEM; quantized slab via the pre-transposed codebook
        # (no per-step vxpose sharing the vex slot with the MXU).
        enc = (row == idx).astype(jnp.float32)                       # (K, T)
        quant = jnp.dot(e_t, enc, preferred_element_type=jnp.float32)  # (D, T)
        q_ref[0] = quant.astype(q_ref.dtype)

        diff = quant - x
        sq = diff * diff                                             # (D, T)

        # --- deferred reductions -------------------------------------------
        # Per-tile: fold lanes 128 at a time into persistent scratch (pure
        # VALU adds on aligned lane slices).  The XLU cross-lane reduce runs
        # only once, on the last L tile of this (batch, chunk).
        def accumulate(sq_v, enc_v):
            if use_folded:
                sq_f = sq_v[:, 0:128]
                enc_f = enc_v[:, 0:128]
                for j in range(1, n_lane_chunks):
                    lo = j * 128
                    sq_f = sq_f + sq_v[:, lo:lo + 128]
                    enc_f = enc_f + enc_v[:, lo:lo + 128]
                loss_acc[...] += sq_f
                cnt_acc[...] += enc_f
            else:
                # Single odd-width tile (tile_l == L, L % 128 != 0): only one
                # grid step total, a direct reduce is not in any hot loop.
                loss_acc[:, 0:1] += jnp.sum(sq_v, axis=1, keepdims=True)
                cnt_acc[:, 0:1] += jnp.sum(enc_v, axis=1, keepdims=True)

        if needs_mask:
            # Only the globally-last L tile is partial; full tiles pay no
            # iota/compare/select cost.
            is_last_tile = jnp.logical_and(c == num_chunks - 1,
                                           l == tiles_per_chunk - 1)

            @pl.when(is_last_tile)
            def _():
                base = (c * tiles_per_chunk + l) * tile_l
                lane = jax.lax.broadcasted_iota(jnp.int32, (1, tile_l), 1)
                valid = (base + lane) < seq_len                      # (1, T)
                accumulate(jnp.where(valid, sq, 0.0),
                           jnp.where(valid, enc, 0.0))

            @pl.when(jnp.logical_not(is_last_tile))
            def _():
                accumulate(sq, enc)
        else:
            accumulate(sq, enc)

        # Final cross-lane reduce + store, once per (batch, chunk).
        @pl.when(l == tiles_per_chunk - 1)
        def _():
            total = jnp.sum(jnp.sum(loss_acc[...], axis=1, keepdims=True),
                            axis=0, keepdims=True)                   # (1, 1)
            ploss_ref[0] = total
            pcnt_ref[0] = jnp.sum(cnt_acc[...], axis=1, keepdims=True)  # (K, 1)

    return vq_kernel


def _pick_tile_l(seq_len, target=4096):
    """Largest lane-dense tile <= target, preferring one that divides L."""
    if seq_len <= target:
        return seq_len
    for t in range(target, 0, -128):
        if seq_len % t == 0:
            return t
    return target  # no 128-multiple divisor <= target; last tile gets masked


def vector_quantizer_forward(inputs, embedding, commitment_cost, *,
                             tile_l=None, num_chunks=None,
                             return_encodings=True,
                             vmem_limit_bytes=48 * 1024 * 1024):
    """inputs: (B, D, L) float;  embedding: (K, D) float.

    Returns (quantized (B, D, L), loss, perplexity, encodings (B*L, K)),
    matching the PyTorch VectorQuantizer forward pass.  If
    return_encodings=False the (B*L, K) one-hot (which dominates HBM traffic)
    is skipped and None is returned in its place.
    """
    B, D, L = inputs.shape
    K, D2 = embedding.shape
    assert D == D2
    N = B * L

    if tile_l is None:
        tile_l = _pick_tile_l(L)
    tile_l = min(tile_l, L)
    # Lane-density / legality: tile must be the full L or a multiple of 128.
    assert tile_l == L or tile_l % 128 == 0, \
        "tile_l must equal L or be a multiple of 128"

    num_l_tiles = -(-L // tile_l)
    needs_mask = (L % tile_l) != 0
    if num_chunks is None:
        # 2-way L split gives v7x's second TensorCore independent work even
        # when B is small; neutral on the single-core v5e/v6e.
        num_chunks = 2 if (num_l_tiles >= 2 and num_l_tiles % 2 == 0) else 1
    assert num_l_tiles % num_chunks == 0
    tiles_per_chunk = num_l_tiles // num_chunks

    # Hoisted codebook constants (tiny), passed in rather than recomputed.
    emb_f32 = embedding.astype(jnp.float32)
    emb_t = jnp.transpose(emb_f32)                                       # (D, K)
    half_e_sq = 0.5 * jnp.sum(emb_f32 * emb_f32, axis=1, keepdims=True)  # (K, 1)

    kernel = _make_vq_kernel(K, D, tile_l, L, tiles_per_chunk, num_chunks,
                             needs_mask)

    BC = B * num_chunks
    quant, idx, ploss, pcnt = pl.pallas_call(
        kernel,
        grid=(B, num_chunks, tiles_per_chunk),
        out_shape=(
            jax.ShapeDtypeStruct((B, D, L), inputs.dtype),   # quantized (NCL)
            jax.ShapeDtypeStruct((B, 1, L), jnp.int32),      # encoding indices
            jax.ShapeDtypeStruct((BC, 1, 1), jnp.float32),   # partial sum((q-x)^2)
            jax.ShapeDtypeStruct((BC, K, 1), jnp.float32),   # partial code counts
        ),
        in_specs=[
            pl.BlockSpec((1, D, tile_l),
                         lambda b, c, l: (b, 0, c * tiles_per_chunk + l)),
            pl.BlockSpec((K, D), lambda b, c, l: (0, 0)),    # resident codebook
            pl.BlockSpec((D, K), lambda b, c, l: (0, 0)),    # resident codebook^T
            pl.BlockSpec((K, 1), lambda b, c, l: (0, 0)),    # resident 0.5||e||^2
        ],
        out_specs=(
            pl.BlockSpec((1, D, tile_l),
                         lambda b, c, l: (b, 0, c * tiles_per_chunk + l)),
            pl.BlockSpec((1, 1, tile_l),
                         lambda b, c, l: (b, 0, c * tiles_per_chunk + l)),
            pl.BlockSpec((1, 1, 1), lambda b, c, l: (b * num_chunks + c, 0, 0)),
            pl.BlockSpec((1, K, 1), lambda b, c, l: (b * num_chunks + c, 0, 0)),
        ),
        scratch_shapes=[
            pltpu.VMEM((D, 128), jnp.float32),   # lane-folded loss accumulator
            pltpu.VMEM((K, 128), jnp.float32),   # lane-folded count accumulator
        ],
        compiler_params=pltpu.CompilerParams(
            dimension_semantics=("parallel", "parallel", "arbitrary"),
            vmem_limit_bytes=vmem_limit_bytes,
        ),
    )(inputs, emb_f32, emb_t, half_e_sq)

    # Tiny plain-JAX epilogue: finish the reductions and (optionally) build
    # the dense one-hot the module returns.
    mse = jnp.sum(ploss) / (N * D)
    # q_latent_loss + commitment_cost * e_latent_loss; both equal the same MSE
    # in the forward pass (detach only changes gradients).
    loss = (1.0 + float(commitment_cost)) * mse

    counts = jnp.sum(pcnt[:, :, 0], axis=0)                          # (K,)
    avg_p = counts / N
    perplexity = jnp.exp(-jnp.sum(avg_p * jnp.log(avg_p + 1e-10)))

    encodings = None
    if return_encodings:
        # NOTE: this (N, K) f32 write dominates the op's total HBM traffic;
        # pass return_encodings=False if only loss/perplexity are needed.
        idx_flat = idx.reshape(N)
        encodings = jax.nn.one_hot(idx_flat, K, dtype=jnp.float32)

    # Straight-through estimator: inputs + (quantized - inputs).detach() is
    # numerically just `quantized` in the forward pass.
    # TODO(synk): STE / .detach() gradient routing is a backward-pass concern,
    # not representable in this forward-only kernel.
    return quant, loss, perplexity, encodings


if __name__ == "__main__":
    # module hyper-params
    num_embeddings = 64
    embedding_dim = 32
    commitment_cost = 0.25

    key = jax.random.PRNGKey(0)
    k_e, k_x1, k_x2 = jax.random.split(key, 3)
    # nn.Embedding weight init: uniform(-1/K, 1/K)
    embedding = jax.random.uniform(
        k_e, (num_embeddings, embedding_dim), dtype=jnp.float32,
        minval=-1.0 / num_embeddings, maxval=1.0 / num_embeddings)

    def reference(x, emb):
        B, D, L = x.shape
        x_bld = jnp.transpose(x, (0, 2, 1)).reshape(-1, D)
        d = (jnp.sum(x_bld ** 2, 1, keepdims=True) + jnp.sum(emb ** 2, 1)
             - 2.0 * x_bld @ emb.T)
        i = jnp.argmin(d, axis=1)
        q = emb[i]
        enc = jax.nn.one_hot(i, emb.shape[0], dtype=jnp.float32)
        mse = jnp.mean((q - x_bld) ** 2)
        ls = (1.0 + commitment_cost) * mse
        avg_p = jnp.mean(enc, axis=0)
        perp = jnp.exp(-jnp.sum(avg_p * jnp.log(avg_p + 1e-10)))
        q_ncl = jnp.transpose(q.reshape(B, L, D), (0, 2, 1))
        return q_ncl, ls, perp, enc

    def check(x, **kw):
        quant, loss, perp, enc = vector_quantizer_forward(
            x, embedding, commitment_cost, **kw)
        jax.block_until_ready((quant, loss, perp, enc))
        q_ref, loss_ref, perp_ref, enc_ref = reference(x, embedding)
        assert jnp.allclose(quant, q_ref, atol=1e-5), "quantized mismatch"
        assert jnp.allclose(loss, loss_ref, atol=1e-5, rtol=1e-5), "loss mismatch"
        assert jnp.allclose(perp, perp_ref, atol=1e-4, rtol=1e-5), "perplexity mismatch"
        assert jnp.allclose(enc, enc_ref), "encodings mismatch"

    # 1) auto tile (single full-L tile; L=320 is not a multiple of 128)
    x1 = jax.random.normal(k_x1, (2, embedding_dim, 320), dtype=jnp.float32)
    check(x1)

    # 2) multi-tile with a masked remainder tile (3 tiles of 128, 1 chunk)
    check(x1, tile_l=128)

    # 3) multi-tile, megacore-style 2-way chunked grid (4 tiles of 128, 2 chunks)
    x2 = jax.random.normal(k_x2, (2, embedding_dim, 512), dtype=jnp.float32)
    check(x2, tile_l=128)

    print("KERNEL_OK")
</pallas_src>

<mosaic_0001>
module attributes {stable_mosaic.version = 11 : i64} {
  func.func @vq_kernel(%arg0: i32, %arg1: i32, %arg2: i32, %arg3: memref<1x32x320xf32, #tpu.memory_space<vmem>>, %arg4: memref<64x32xf32, #tpu.memory_space<vmem>>, %arg5: memref<32x64xf32, #tpu.memory_space<vmem>>, %arg6: memref<64x1xf32, #tpu.memory_space<vmem>>, %arg7: memref<1x32x320xf32, #tpu.memory_space<vmem>>, %arg8: memref<1x1x320xi32, #tpu.memory_space<vmem>>, %arg9: memref<1x1x1xf32, #tpu.memory_space<vmem>>, %arg10: memref<1x64x1xf32, #tpu.memory_space<vmem>>, %arg11: memref<32x128xf32, #tpu.memory_space<vmem>>, %arg12: memref<64x128xf32, #tpu.memory_space<vmem>>) attributes {dimension_semantics = [#tpu.dimension_semantics<parallel>, #tpu.dimension_semantics<parallel>, #tpu.dimension_semantics<arbitrary>], iteration_bounds = array<i64: 2, 1, 1>, scalar_prefetch = 0 : i64, scratch_operands = 2 : i64, tpu.core_type = #tpu.core_type<tc>, window_params = [{transform_indices = @transform_0, window_bounds = array<i64: 1, 32, 320>}, {pipeline_mode = #tpu.pipeline_mode<synchronous>, transform_indices = @transform_1, window_bounds = array<i64: 64, 32>}, {pipeline_mode = #tpu.pipeline_mode<synchronous>, transform_indices = @transform_2, window_bounds = array<i64: 32, 64>}, {pipeline_mode = #tpu.pipeline_mode<synchronous>, transform_indices = @transform_3, window_bounds = array<i64: 64, 1>}, {transform_indices = @transform_4, window_bounds = array<i64: 1, 32, 320>}, {transform_indices = @transform_5, window_bounds = array<i64: 1, 1, 320>}, {transform_indices = @transform_6, window_bounds = array<i64: 1, 1, 1>}, {transform_indices = @transform_7, window_bounds = array<i64: 1, 64, 1>}]} {
    %c0_i32 = arith.constant 0 : i32
    %0 = arith.cmpi eq, %arg2, %c0_i32 : i32
    %1 = arith.extui %0 : i1 to i32
    %c0_i32_0 = arith.constant 0 : i32
    %2 = arith.cmpi ne, %1, %c0_i32_0 : i32
    scf.if %2 {
      %cst_30 = arith.constant 0.000000e+00 : f32
      %46 = vector.broadcast %cst_30 : f32 to vector<32x128xf32>
      %c0_31 = arith.constant 0 : index
      %c0_32 = arith.constant 0 : index
      %47 = vector.load %arg11[%c0_31, %c0_32] : memref<32x128xf32, #tpu.memory_space<vmem>>, vector<32x128xf32>
      tpu.vector_store %arg11[%c0_31, %c0_32], %46 {strides = array<i32>} : memref<32x128xf32, #tpu.memory_space<vmem>>, vector<32x128xf32>,
      %cst_33 = arith.constant 0.000000e+00 : f32
      %48 = vector.broadcast %cst_33 : f32 to vector<64x128xf32>
      %c0_34 = arith.constant 0 : index
      %c0_35 = arith.constant 0 : index
      %49 = vector.load %arg12[%c0_34, %c0_35] : memref<64x128xf32, #tpu.memory_space<vmem>>, vector<64x128xf32>
      tpu.vector_store %arg12[%c0_34, %c0_35], %48 {strides = array<i32>} : memref<64x128xf32, #tpu.memory_space<vmem>>, vector<64x128xf32>,
    } else {
    }
    %c0 = arith.constant 0 : index
    %c0_1 = arith.constant 0 : index
    %c0_2 = arith.constant 0 : index
    %3 = vector.load %arg3[%c0, %c0_1, %c0_2] : memref<1x32x320xf32, #tpu.memory_space<vmem>>, vector<1x32x320xf32>
    %4 = vector.shape_cast %3 : vector<1x32x320xf32> to vector<32x320xf32>
    %c0_3 = arith.constant 0 : index
    %c0_4 = arith.constant 0 : index
    %5 = vector.load %arg4[%c0_3, %c0_4] : memref<64x32xf32, #tpu.memory_space<vmem>>, vector<64x32xf32>
    %c0_5 = arith.constant 0 : index
    %c0_6 = arith.constant 0 : index
    %6 = vector.load %arg5[%c0_5, %c0_6] : memref<32x64xf32, #tpu.memory_space<vmem>>, vector<32x64xf32>
    %c0_7 = arith.constant 0 : index
    %c0_8 = arith.constant 0 : index
    %7 = vector.load %arg6[%c0_7, %c0_8] : memref<64x1xf32, #tpu.memory_space<vmem>>, vector<64x1xf32>
    %cst = arith.constant dense<0.000000e+00> : vector<64x320xf32>
    %8 = tpu.matmul %5, %4, %cst {dimension_numbers = #tpu.dot_dimension_numbers<[1], [0], [0], [1], [0, 0, 1, 1], [], []>} : vector<64x32xf32>, vector<32x320xf32>, vector<64x320xf32> -> vector<64x320xf32>
    %9 = vector.broadcast %7 : vector<64x1xf32> to vector<64x320xf32>
    %10 = arith.subf %9, %8 : vector<64x320xf32>
    %cst_9 = arith.constant dense<0x7F800000> : vector<320xf32>
    %11 = vector.multi_reduction <minimumf>, %10, %cst_9 [0] : vector<64x320xf32> to vector<320xf32>
    %12 = vector.shape_cast %11 : vector<320xf32> to vector<1x320xf32>
    %13 = tpu.iota {dimensions = array<i32: 0>} : vector<64x320xi32>
    %14 = vector.broadcast %12 : vector<1x320xf32> to vector<64x320xf32>
    %15 = arith.cmpf ole, %10, %14 : vector<64x320xf32>
    %c64_i32 = arith.constant 64 : i32
    %16 = vector.broadcast %c64_i32 : i32 to vector<64x320xi32>
    %17 = arith.select %15, %13, %16 : vector<64x320xi1>, vector<64x320xi32>
    %cst_10 = arith.constant dense<2147483647> : vector<320xi32>
    %18 = vector.multi_reduction <minsi>, %17, %cst_10 [0] : vector<64x320xi32> to vector<320xi32>
    %19 = vector.shape_cast %18 : vector<320xi32> to vector<1x320xi32>
    %c0_11 = arith.constant 0 : index
    %c0_12 = arith.constant 0 : index
    %c0_13 = arith.constant 0 : index
    %20 = vector.load %arg8[%c0_11, %c0_12, %c0_13] : memref<1x1x320xi32, #tpu.memory_space<vmem>>, vector<1x1x320xi32>
    %21 = vector.shape_cast %20 : vector<1x1x320xi32> to vector<1x320xi32>
    %22 = vector.shape_cast %19 : vector<1x320xi32> to vector<1x1x320xi32>
    tpu.vector_store %arg8[%c0_11, %c0_12, %c0_13], %22 {strides = array<i32>} : memref<1x1x320xi32, #tpu.memory_space<vmem>>, vector<1x1x320xi32>,
    %23 = vector.broadcast %19 : vector<1x320xi32> to vector<64x320xi32>
    %24 = arith.cmpi eq, %13, %23 : vector<64x320xi32>
    %25 = arith.extui %24 : vector<64x320xi1> to vector<64x320xi32>
    %26 = arith.sitofp %25 : vector<64x320xi32> to vector<64x320xf32>
    %cst_14 = arith.constant dense<0.000000e+00> : vector<32x320xf32>
    %27 = tpu.matmul %6, %26, %cst_14 {dimension_numbers = #tpu.dot_dimension_numbers<[1], [0], [0], [1], [0, 0, 1, 1], [], []>} : vector<32x64xf32>, vector<64x320xf32>, vector<32x320xf32> -> vector<32x320xf32>
    %c0_15 = arith.constant 0 : index
    %c0_16 = arith.constant 0 : index
    %c0_17 = arith.constant 0 : index
    %28 = vector.load %arg7[%c0_15, %c0_16, %c0_17] : memref<1x32x320xf32, #tpu.memory_space<vmem>>, vector<1x32x320xf32>
    %29 = vector.shape_cast %28 : vector<1x32x320xf32> to vector<32x320xf32>
    %30 = vector.shape_cast %27 : vector<32x320xf32> to vector<1x32x320xf32>
    tpu.vector_store %arg7[%c0_15, %c0_16, %c0_17], %30 {strides = array<i32>} : memref<1x32x320xf32, #tpu.memory_space<vmem>>, vector<1x32x320xf32>,
    %31 = arith.subf %27, %4 : vector<32x320xf32>
    %32 = arith.mulf %31, %31 : vector<32x320xf32>
    %c0_18 = arith.constant 0 : index
    %c0_19 = arith.constant 0 : index
    %33 = vector.load %arg11[%c0_18, %c0_19] : memref<32x128xf32, #tpu.memory_space<vmem>>, vector<32x1xf32>
    %cst_20 = arith.constant dense<0.000000e+00> : vector<32xf32>
    %34 = vector.multi_reduction <add>, %32, %cst_20 [1] : vector<32x320xf32> to vector<32xf32>
    %35 = vector.shape_cast %34 : vector<32xf32> to vector<32x1xf32>
    %36 = arith.addf %33, %35 : vector<32x1xf32>
    %c0_21 = arith.constant 0 : index
    %c0_22 = arith.constant 0 : index
    %37 = vector.load %arg11[%c0_21, %c0_22] : memref<32x128xf32, #tpu.memory_space<vmem>>, vector<32x1xf32>
    tpu.vector_store %arg11[%c0_21, %c0_22], %36 {strides = array<i32>} : memref<32x128xf32, #tpu.memory_space<vmem>>, vector<32x1xf32>,
    %c0_23 = arith.constant 0 : index
    %c0_24 = arith.constant 0 : index
    %38 = vector.load %arg12[%c0_23, %c0_24] : memref<64x128xf32, #tpu.memory_space<vmem>>, vector<64x1xf32>
    %cst_25 = arith.constant dense<0.000000e+00> : vector<64xf32>
    %39 = vector.multi_reduction <add>, %26, %cst_25 [1] : vector<64x320xf32> to vector<64xf32>
    %40 = vector.shape_cast %39 : vector<64xf32> to vector<64x1xf32>
    %41 = arith.addf %38, %40 : vector<64x1xf32>
    %c0_26 = arith.constant 0 : index
    %c0_27 = arith.constant 0 : index
    %42 = vector.load %arg12[%c0_26, %c0_27] : memref<64x128xf32, #tpu.memory_space<vmem>>, vector<64x1xf32>
    tpu.vector_store %arg12[%c0_26, %c0_27], %41 {strides = array<i32>} : memref<64x128xf32, #tpu.memory_space<vmem>>, vector<64x1xf32>,
    %c0_i32_28 = arith.constant 0 : i32
    %43 = arith.cmpi eq, %arg2, %c0_i32_28 : i32
    %44 = arith.extui %43 : i1 to i32
    %c0_i32_29 = arith.constant 0 : i32
    %45 = arith.cmpi ne, %44, %c0_i32_29 : i32
    scf.if %45 {
      %c0_30 = arith.constant 0 : index
      %c0_31 = arith.constant 0 : index
      %46 = vector.load %arg11[%c0_30, %c0_31] : memref<32x128xf32, #tpu.memory_space<vmem>>, vector<32x128xf32>
      %cst_32 = arith.constant dense<0.000000e+00> : vector<32xf32>
      %47 = vector.multi_reduction <add>, %46, %cst_32 [1] : vector<32x128xf32> to vector<32xf32>
      %48 = vector.shape_cast %47 : vector<32xf32> to vector<32x1xf32>
      %cst_33 = arith.constant dense<0.000000e+00> : vector<1xf32>
      %49 = vector.multi_reduction <add>, %48, %cst_33 [0] : vector<32x1xf32> to vector<1xf32>
      %50 = vector.shape_cast %49 : vector<1xf32> to vector<1x1xf32>
      %c0_34 = arith.constant 0 : index
      %c0_35 = arith.constant 0 : index
      %c0_36 = arith.constant 0 : index
      %51 = vector.load %arg9[%c0_34, %c0_35, %c0_36] : memref<1x1x1xf32, #tpu.memory_space<vmem>>, vector<1x1x1xf32>
      %52 = vector.shape_cast %51 : vector<1x1x1xf32> to vector<1x1xf32>
      %53 = vector.shape_cast %50 : vector<1x1xf32> to vector<1x1x1xf32>
      tpu.vector_store %arg9[%c0_34, %c0_35, %c0_36], %53 {strides = array<i32>} : memref<1x1x1xf32, #tpu.memory_space<vmem>>, vector<1x1x1xf32>,
      %c0_37 = arith.constant 0 : index
      %c0_38 = arith.constant 0 : index
      %54 = vector.load %arg12[%c0_37, %c0_38] : memref<64x128xf32, #tpu.memory_space<vmem>>, vector<64x128xf32>
      %cst_39 = arith.constant dense<0.000000e+00> : vector<64xf32>
      %55 = vector.multi_reduction <add>, %54, %cst_39 [1] : vector<64x128xf32> to vector<64xf32>
      %56 = vector.shape_cast %55 : vector<64xf32> to vector<64x1xf32>
      %c0_40 = arith.constant 0 : index
      %c0_41 = arith.constant 0 : index
      %c0_42 = arith.constant 0 : index
      %57 = vector.load %arg10[%c0_40, %c0_41, %c0_42] : memref<1x64x1xf32, #tpu.memory_space<vmem>>, vector<1x64x1xf32>
      %58 = vector.shape_cast %57 : vector<1x64x1xf32> to vector<64x1xf32>
      %59 = vector.shape_cast %56 : vector<64x1xf32> to vector<1x64x1xf32>
      tpu.vector_store %arg10[%c0_40, %c0_41, %c0_42], %59 {strides = array<i32>} : memref<1x64x1xf32, #tpu.memory_space<vmem>>, vector<1x64x1xf32>,
    } else {
    }
    return
  }
  func.func @transform_0(%arg0: i32, %arg1: i32, %arg2: i32) -> (i32, i32, i32) {
    %c1_i32 = arith.constant 1 : i32
    %0 = arith.muli %arg1, %c1_i32 : i32
    %1 = arith.addi %0, %arg2 : i32
    %c0_i32 = arith.constant 0 : i32
    %c0_i32_0 = arith.constant 0 : i32
    return %arg0, %c0_i32, %1 : i32, i32, i32
  }
  func.func @transform_1(%arg0: i32, %arg1: i32, %arg2: i32) -> (i32, i32) {
    %c0_i32 = arith.constant 0 : i32
    %c0_i32_0 = arith.constant 0 : i32
    %c0_i32_1 = arith.constant 0 : i32
    return %c0_i32, %c0_i32_0 : i32, i32
  }
  func.func @transform_2(%arg0: i32, %arg1: i32, %arg2: i32) -> (i32, i32) {
    %c0_i32 = arith.constant 0 : i32
    %c0_i32_0 = arith.constant 0 : i32
    %c0_i32_1 = arith.constant 0 : i32
    return %c0_i32, %c0_i32_0 : i32, i32
  }
  func.func @transform_3(%arg0: i32, %arg1: i32, %arg2: i32) -> (i32, i32) {
    %c0_i32 = arith.constant 0 : i32
    %c0_i32_0 = arith.constant 0 : i32
    %c0_i32_1 = arith.constant 0 : i32
    return %c0_i32, %c0_i32_0 : i32, i32
  }
  func.func @transform_4(%arg0: i32, %arg1: i32, %arg2: i32) -> (i32, i32, i32) {
    %c1_i32 = arith.constant 1 : i32
    %0 = arith.muli %arg1, %c1_i32 : i32
    %1 = arith.addi %0, %arg2 : i32
    %c0_i32 = arith.constant 0 : i32
    %c0_i32_0 = arith.constant 0 : i32
    return %arg0, %c0_i32, %1 : i32, i32, i32
  }
  func.func @transform_5(%arg0: i32, %arg1: i32, %arg2: i32) -> (i32, i32, i32) {
    %c1_i32 = arith.constant 1 : i32
    %0 = arith.muli %arg1, %c1_i32 : i32
    %1 = arith.addi %0, %arg2 : i32
    %c0_i32 = arith.constant 0 : i32
    %c0_i32_0 = arith.constant 0 : i32
    return %arg0, %c0_i32, %1 : i32, i32, i32
  }
  func.func @transform_6(%arg0: i32, %arg1: i32, %arg2: i32) -> (i32, i32, i32) {
    %c1_i32 = arith.constant 1 : i32
    %0 = arith.muli %arg0, %c1_i32 : i32
    %1 = arith.addi %0, %arg1 : i32
    %c0_i32 = arith.constant 0 : i32
    %c0_i32_0 = arith.constant 0 : i32
    %c0_i32_1 = arith.constant 0 : i32
    return %1, %c0_i32, %c0_i32_0 : i32, i32, i32
  }
  func.func @transform_7(%arg0: i32, %arg1: i32, %arg2: i32) -> (i32, i32, i32) {
    %c1_i32 = arith.constant 1 : i32
    %0 = arith.muli %arg0, %c1_i32 : i32
    %1 = arith.addi %0, %arg1 : i32
    %c0_i32 = arith.constant 0 : i32
    %c0_i32_0 = arith.constant 0 : i32
    %c0_i32_1 = arith.constant 0 : i32
    return %1, %c0_i32, %c0_i32_0 : i32, i32, i32
  }
}

</mosaic_0001>

<llo_original>
// kernel: tpu_custom_call.1
$region0: #{tpu_custom_call.1}
  #allocation0 [shape = 'u32[]', space=smem, size = 0x4, offset = 0x4, fixed_abs, tag = 'smem constant byte address 0x4 - core index']
  #allocation1 [shape = 'u32[144,128]{1,0:T(1,128)}', space=vmem, size = 0x12000, scoped, tag = 'internal scratch']
  #allocation2 [shape = 'f32[32,128]{1,0:T(8,128)}', space=vmem, size = 0x4000, scoped, tag = 'scratch operand']
  #allocation3 [shape = 'f32[64,128]{1,0:T(8,128)}', space=vmem, size = 0x8000, scoped, tag = 'scratch operand']
  %s0 = inlined_call_operand.hbm [shape: f32[2,32,320], index: 0, kind: input, shape index: {}]
  %s1 = inlined_call_operand.vmem [shape: f32[64,32], index: 1, kind: input, shape index: {}]
  %s2 = inlined_call_operand.vmem [shape: f32[32,64], index: 2, kind: input, shape index: {}]
  %s3 = inlined_call_operand.vmem [shape: f32[64,1], index: 3, kind: input, shape index: {}]
  %s4 = inlined_call_operand.hbm [shape: f32[2,32,320], index: 4, kind: output, shape index: {0}]
  %s5 = inlined_call_operand.hbm [shape: s32[2,1,320], index: 5, kind: output, shape index: {1}]
  %s6 = inlined_call_operand.vmem [shape: f32[2,1,1], index: 6, kind: output, shape index: {2}]
  %s7 = inlined_call_operand.vmem [shape: f32[2,64,1], index: 7, kind: output, shape index: {3}]
  %8 = xla_tuple %s4, %s5, %s6, %s7
  %s9 = sld [smem:[#allocation0]]
  $region85: #{tpu_custom_call.1} parent=0
    _
  %s11 = ssub.s32 1, %s9
  %s12 = scalar_select 0, %s11, %s9
  $region1: #{tpu_custom_call.1} parent=0
    #allocation4 [shape = 'u8[98304]{0}', space=vmem, size = 0x18000, scoped, tag = 'input window, operand 0']
    #allocation5 [shape = 's32[2]{0}', space=sflag, size = 0x8, scoped, tag = 'scoped memory for tpu_custom_call.1']
    #allocation6 [shape = 's32[2]{0}', space=sflag, size = 0x8, scoped, tag = 'scoped memory for tpu_custom_call.1']
    #allocation7 [shape = 'u8[98304]{0}', space=vmem, size = 0x18000, scoped, tag = 'output window, operand 0']
    #allocation8 [shape = 'u8[3072]{0}', space=vmem, size = 0xc00, scoped, tag = 'output window, operand 1']
    #allocation9 [shape = 's32[2]{0}', space=sflag, size = 0x8, scoped, tag = 'scoped memory for tpu_custom_call.1']
    %13 = vsyncpa [#allocation5], 0
    %s14 = scalar_lea.sflag [#allocation5], 1
    %15 = vsyncpa %s14, 0
    %16 = vsyncpa [#allocation6], 0
    %s17 = scalar_lea.sflag [#allocation6], 1
    %18 = vsyncpa %s17, 0
    %19 = vsyncpa [#allocation9], 0
    %s20 = scalar_lea.sflag [#allocation9], 1
    %21 = vsyncpa %s20, 0
    loop: start=0, step=1, limit=4
    $region2: #{tpu_custom_call.1} parent=1 // loop_pre_header
      _
    $region3: #{tpu_custom_call.1} parent=1 // loop_header
      %s23 = sphi 0, %s27
      %p24 = scmp.ge.s32.totalorder %s23, 4
      %s30 = sphi 0, %s49
      %s31 = sphi 0, %s45
      %s32 = sphi 0, %s41
      %s33 = sphi 0, %s30
      %s34 = sphi 0, %s31
      %s35 = sphi 0, %s32
      %s36 = sphi 0, %s33
      %s37 = sphi 0, %s34
      %s38 = sphi 0, %s35
      %s56 = sphi 0, %s58
      %s59 = sphi 0, %s56
      %s60 = sphi 0, %s59
      %s76 = sphi 0, %s60
      %s80 = sphi 0, %s80
      %s82 = sphi 0, %s80
      %s83 = sphi 0, %s82
      %s97 = sphi 0, %s83
      %s101 = sphi 0, %s101
      %s103 = sphi 0, %s101
      %s104 = sphi 0, %s103
      %s118 = sphi 0, %s104
      %s122 = sphi 0, %s122
      %s124 = sphi 0, %s122
      %s125 = sphi 0, %s124
      %s139 = sphi 0, %s125
      %s149 = sphi 0, %s151
      %s152 = sphi 0, %s149
      %s153 = sphi 0, %s152
      %s169 = sphi 0, %s153
      %s179 = sphi 0, %s181
      %s182 = sphi 0, %s179
      %s183 = sphi 0, %s182
      %s199 = sphi 0, %s183
      %s207 = sphi 0, %s209
      %s210 = sphi 0, %s207
      %s211 = sphi 0, %s210
      %s227 = sphi 0, %s211
      %s235 = sphi 0, %s237
      %s238 = sphi 0, %s235
      %s239 = sphi 0, %s238
      %s255 = sphi 0, %s239
    $region4: #{tpu_custom_call.1} parent=1 // loop_header_branch
      %26 = sbr.rel (%p24) target = $region8
    $region5: #{tpu_custom_call.1} parent=1 // loop_body
      %s28 = ssub.s32 %s23, 1
      %s29 = ssub.s32 %s23, 2
      %s39 = sadd.s32 1, %s32
      %p40 = scmp.ge.s32.totalorder %s39, 1
      %s41 = scalar_select %p40, 0, %s39
      %s42 = sadd.s32 1, %s31
      %s43 = scalar_select %p40, %s42, %s31
      %p44 = scmp.ge.s32.totalorder %s43, 1
      %s45 = scalar_select %p44, 0, %s43
      %s46 = sadd.s32 1, %s30
      %s47 = scalar_select %p44, %s46, %s30
      %p48 = scmp.ge.s32.totalorder %s47, 2
      %s49 = scalar_select %p48, 0, %s47
      %s50 = sadd.s32 %s31, %s32
      %s51 = sadd.s32 %s45, %s41
      %s52 = ssub.s32 %s30, %s49
      %s53 = ssub.s32 %s50, %s51
      %s54 = sor.u32 %s52, %s53
      %p55 = scmp.eq.s32.totalorder %s54, 0
      %s57 = sadd.s32 %s56, 1
      %s58 = scalar_select %p55, %s56, %s57
      %p61 = pneg %p55
      %p62 = scmp.eq.s32.totalorder %s23, 1
      %p63 = por %p61, %p62
      %p64 = scmp.ne.s32.totalorder %s56, %s59
      %p65 = scmp.eq.s32.totalorder %s23, 0
      %p66 = por %p64, %p65
      %p67 = scmp.ne.s32.totalorder %s56, %s59
      %p68 = scmp.eq.s32.totalorder %s28, 1
      %p69 = por %p67, %p68
      %p70 = scmp.ne.s32.totalorder %s59, %s60
      %p71 = scmp.eq.s32.totalorder %s28, 0
      %p72 = por %p70, %p71
      %p73 = scmp.ne.s32.totalorder %s59, %s60
      %p74 = scmp.eq.s32.totalorder %s29, 1
      %p75 = por %p73, %p74
      %p77 = scmp.ne.s32.totalorder %s60, %s76
      %p78 = scmp.eq.s32.totalorder %s29, 0
      %p79 = por %p77, %p78
      %s81 = sadd.s32 %s80, 1
      %p84 = scmp.eq.s32.totalorder %s23, 1
      %p85 = scmp.ne.s32.totalorder %s80, %s82
      %p86 = scmp.eq.s32.totalorder %s23, 0
      %p87 = por %p85, %p86
      %p88 = scmp.ne.s32.totalorder %s80, %s82
      %p89 = scmp.eq.s32.totalorder %s28, 1
      %p90 = por %p88, %p89
      %p91 = scmp.ne.s32.totalorder %s82, %s83
      %p92 = scmp.eq.s32.totalorder %s28, 0
      %p93 = por %p91, %p92
      %p94 = scmp.ne.s32.totalorder %s82, %s83
      %p95 = scmp.eq.s32.totalorder %s29, 1
      %p96 = por %p94, %p95
      %p98 = scmp.ne.s32.totalorder %s83, %s97
      %p99 = scmp.eq.s32.totalorder %s29, 0
      %p100 = por %p98, %p99
      %s102 = sadd.s32 %s101, 1
      %p105 = scmp.eq.s32.totalorder %s23, 1
      %p106 = scmp.ne.s32.totalorder %s101, %s103
      %p107 = scmp.eq.s32.totalorder %s23, 0
      %p108 = por %p106, %p107
      %p109 = scmp.ne.s32.totalorder %s101, %s103
      %p110 = scmp.eq.s32.totalorder %s28, 1
      %p111 = por %p109, %p110
      %p112 = scmp.ne.s32.totalorder %s103, %s104
      %p113 = scmp.eq.s32.totalorder %s28, 0
      %p114 = por %p112, %p113
      %p115 = scmp.ne.s32.totalorder %s103, %s104
      %p116 = scmp.eq.s32.totalorder %s29, 1
      %p117 = por %p115, %p116
      %p119 = scmp.ne.s32.totalorder %s104, %s118
      %p120 = scmp.eq.s32.totalorder %s29, 0
      %p121 = por %p119, %p120
      %s123 = sadd.s32 %s122, 1
      %p126 = scmp.eq.s32.totalorder %s23, 1
      %p127 = scmp.ne.s32.totalorder %s122, %s124
      %p128 = scmp.eq.s32.totalorder %s23, 0
      %p129 = por %p127, %p128
      %p130 = scmp.ne.s32.totalorder %s122, %s124
      %p131 = scmp.eq.s32.totalorder %s28, 1
      %p132 = por %p130, %p131
      %p133 = scmp.ne.s32.totalorder %s124, %s125
      %p134 = scmp.eq.s32.totalorder %s28, 0
      %p135 = por %p133, %p134
      %p136 = scmp.ne.s32.totalorder %s124, %s125
      %p137 = scmp.eq.s32.totalorder %s29, 1
      %p138 = por %p136, %p137
      %p140 = scmp.ne.s32.totalorder %s125, %s139
      %p141 = scmp.eq.s32.totalorder %s29, 0
      %p142 = por %p140, %p141
      %s143 = sadd.s32 %s31, %s32
      %s144 = sadd.s32 %s45, %s41
      %s145 = ssub.s32 %s30, %s49
      %s146 = ssub.s32 %s143, %s144
      %s147 = sor.u32 %s145, %s146
      %p148 = scmp.eq.s32.totalorder %s147, 0
      %s150 = sadd.s32 %s149, 1
      %s151 = scalar_select %p148, %s149, %s150
      %p154 = pneg %p148
      %p155 = scmp.eq.s32.totalorder %s23, 1
      %p156 = por %p154, %p155
      %p157 = scmp.ne.s32.totalorder %s149, %s152
      %p158 = scmp.eq.s32.totalorder %s23, 0
      %p159 = por %p157, %p158
      %p160 = scmp.ne.s32.totalorder %s149, %s152
      %p161 = scmp.eq.s32.totalorder %s28, 1
      %p162 = por %p160, %p161
      %p163 = scmp.ne.s32.totalorder %s152, %s153
      %p164 = scmp.eq.s32.totalorder %s28, 0
      %p165 = por %p163, %p164
      %p166 = scmp.ne.s32.totalorder %s152, %s153
      %p167 = scmp.eq.s32.totalorder %s29, 1
      %p168 = por %p166, %p167
      %p170 = scmp.ne.s32.totalorder %s153, %s169
      %p171 = scmp.eq.s32.totalorder %s29, 0
      %p172 = por %p170, %p171
      %s173 = sadd.s32 %s31, %s32
      %s174 = sadd.s32 %s45, %s41
      %s175 = ssub.s32 %s30, %s49
      %s176 = ssub.s32 %s173, %s174
      %s177 = sor.u32 %s175, %s176
      %p178 = scmp.eq.s32.totalorder %s177, 0
      %s180 = sadd.s32 %s179, 1
      %s181 = scalar_select %p178, %s179, %s180
      %p184 = pneg %p178
      %p185 = scmp.eq.s32.totalorder %s23, 1
      %p186 = por %p184, %p185
      %p187 = scmp.ne.s32.totalorder %s179, %s182
      %p188 = scmp.eq.s32.totalorder %s23, 0
      %p189 = por %p187, %p188
      %p190 = scmp.ne.s32.totalorder %s179, %s182
      %p191 = scmp.eq.s32.totalorder %s28, 1
      %p192 = por %p190, %p191
      %p193 = scmp.ne.s32.totalorder %s182, %s183
      %p194 = scmp.eq.s32.totalorder %s28, 0
      %p195 = por %p193, %p194
      %p196 = scmp.ne.s32.totalorder %s182, %s183
      %p197 = scmp.eq.s32.totalorder %s29, 1
      %p198 = por %p196, %p197
      %p200 = scmp.ne.s32.totalorder %s183, %s199
      %p201 = scmp.eq.s32.totalorder %s29, 0
      %p202 = por %p200, %p201
      %s203 = sadd.s32 %s30, %s31
      %s204 = sadd.s32 %s49, %s45
      %s205 = ssub.s32 %s203, %s204
      %p206 = scmp.eq.s32.totalorder %s205, 0
      %s208 = sadd.s32 %s207, 1
      %s209 = scalar_select %p206, %s207, %s208
      %p212 = pneg %p206
      %p213 = scmp.eq.s32.totalorder %s23, 1
      %p214 = por %p212, %p213
      %p215 = scmp.ne.s32.totalorder %s207, %s210
      %p216 = scmp.eq.s32.totalorder %s23, 0
      %p217 = por %p215, %p216
      %p218 = scmp.ne.s32.totalorder %s207, %s210
      %p219 = scmp.eq.s32.totalorder %s28, 1
      %p220 = por %p218, %p219
      %p221 = scmp.ne.s32.totalorder %s210, %s211
      %p222 = scmp.eq.s32.totalorder %s28, 0
      %p223 = por %p221, %p222
      %p224 = scmp.ne.s32.totalorder %s210, %s211
      %p225 = scmp.eq.s32.totalorder %s29, 1
      %p226 = por %p224, %p225
      %p228 = scmp.ne.s32.totalorder %s211, %s227
      %p229 = scmp.eq.s32.totalorder %s29, 0
      %p230 = por %p228, %p229
      %s231 = sadd.s32 %s30, %s31
      %s232 = sadd.s32 %s49, %s45
      %s233 = ssub.s32 %s231, %s232
      %p234 = scmp.eq.s32.totalorder %s233, 0
      %s236 = sadd.s32 %s235, 1
      %s237 = scalar_select %p234, %s235, %s236
      %p240 = pneg %p234
      %p241 = scmp.eq.s32.totalorder %s23, 1
      %p242 = por %p240, %p241
      %p243 = scmp.ne.s32.totalorder %s235, %s238
      %p244 = scmp.eq.s32.totalorder %s23, 0
      %p245 = por %p243, %p244
      %p246 = scmp.ne.s32.totalorder %s235, %s238
      %p247 = scmp.eq.s32.totalorder %s28, 1
      %p248 = por %p246, %p247
      %p249 = scmp.ne.s32.totalorder %s238, %s239
      %p250 = scmp.eq.s32.totalorder %s28, 0
      %p251 = por %p249, %p250
      %p252 = scmp.ne.s32.totalorder %s238, %s239
      %p253 = scmp.eq.s32.totalorder %s29, 1
      %p254 = por %p252, %p253
      %p256 = scmp.ne.s32.totalorder %s239, %s255
      %p257 = scmp.eq.s32.totalorder %s29, 0
      %p258 = por %p256, %p257
      %p259 = scmp.le.s32.totalorder 1, %s23
      %p260 = scmp.lt.s32.totalorder %s23, 3
      %p261 = pnand %p259, %p260
      %p262 = pneg %p261
      // Predicated region
      $region9: #{tpu_custom_call.1} parent=5 // pred_check
        _
      $region10: #{tpu_custom_call.1} parent=5 // pred_check_branch
        %264 = sbr.rel (%p261) target = $region12
      $region11: #{tpu_custom_call.1} parent=5 // pred_region
        %s265 = ssub.s32 %s23, 1
        // Predicated region
        $region13: #{tpu_custom_call.1} parent=11 // pred_check
          %p266 = pneg %p93
        $region14: #{tpu_custom_call.1} parent=11 // pred_check_branch
          %268 = sbr.rel (%p266) target = $region16
        $region15: #{tpu_custom_call.1} parent=11 // pred_region
          _
        $region16: #{tpu_custom_call.1} parent=11 // pred_fallthru
          _
        // Predicated region
        $region17: #{tpu_custom_call.1} parent=11 // pred_check
          %p269 = pneg %p114
        $region18: #{tpu_custom_call.1} parent=11 // pred_check_branch
          %271 = sbr.rel (%p269) target = $region20
        $region19: #{tpu_custom_call.1} parent=11 // pred_region
          _
        $region20: #{tpu_custom_call.1} parent=11 // pred_fallthru
          _
        // Predicated region
        $region21: #{tpu_custom_call.1} parent=11 // pred_check
          %p272 = pneg %p135
        $region22: #{tpu_custom_call.1} parent=11 // pred_check_branch
          %274 = sbr.rel (%p272) target = $region24
        $region23: #{tpu_custom_call.1} parent=11 // pred_region
          _
        $region24: #{tpu_custom_call.1} parent=11 // pred_fallthru
          _
      $region12: #{tpu_custom_call.1} parent=5 // pred_fallthru
        _
      %p275 = scmp.lt.s32.totalorder %s23, 2
      // Predicated region
      $region25: #{tpu_custom_call.1} parent=5 // pred_check
        %p276 = pneg %p275
      $region26: #{tpu_custom_call.1} parent=5 // pred_check_branch
        %278 = sbr.rel (%p276) target = $region28
      $region27: #{tpu_custom_call.1} parent=5 // pred_region
        // Predicated region
        $region29: #{tpu_custom_call.1} parent=27 // pred_check
          %p279 = pneg %p66
        $region30: #{tpu_custom_call.1} parent=27 // pred_check_branch
          %281 = sbr.rel (%p279) target = $region32
        $region31: #{tpu_custom_call.1} parent=27 // pred_region
          %s282 = sand.u32 %s56, 1
          %s283 = scalar_lea.sflag [#allocation5], %s282
          %s284 = sand.u32 %s56, 1
          %s285 = smul.addr %s284, 96
          %s286 = scalar_lea.vmem [#allocation4], %s285
          %s287 = sadd.s32 %s31, %s32
          %s288 = smul.u32 3, %s287
          %s290 = ssub.s32 1536, 1536
          %291 = vsyncadd %s283, %s290
          %s292 = smul.addr %s30, 12
          %s293 = sadd.s32 %s288, %s292
          %s294 = smul.addr %s293, 128
          %s295 = scalar_lea.hbm %s0, %s294
          %s296 = sshll.u32 %s286, 4
          %s297 = int_to_ptr.vmem [resolvable:$true] %s296
          %302 = dma.hbm_to_vmem [thread:$0]  %s295, 1536, %s297, %s283, 384, 384, 24
        $region32: #{tpu_custom_call.1} parent=27 // pred_fallthru
          _
      $region28: #{tpu_custom_call.1} parent=5 // pred_fallthru
        _
      %p303 = scmp.le.s32.totalorder 1, %s23
      %p304 = scmp.lt.s32.totalorder %s23, 3
      %p305 = pnand %p303, %p304
      %p306 = pneg %p305
      // Predicated region
      $region33: #{tpu_custom_call.1} parent=5 // pred_check
        _
      $region34: #{tpu_custom_call.1} parent=5 // pred_check_branch
        %308 = sbr.rel (%p305) target = $region36
      $region35: #{tpu_custom_call.1} parent=5 // pred_region
        %s309 = ssub.s32 %s23, 1
        %s310 = sand.u32 %s59, 1
        %s311 = scalar_lea.sflag [#allocation5], %s310
        %s312 = sand.u32 %s59, 1
        %s313 = smul.addr %s312, 96
        %s314 = scalar_lea.vmem [#allocation4], %s313
        // Predicated region
        $region37: #{tpu_custom_call.1} parent=35 // pred_check
          %p315 = pneg %p72
        $region38: #{tpu_custom_call.1} parent=35 // pred_check_branch
          %317 = sbr.rel (%p315) target = $region40
        $region39: #{tpu_custom_call.1} parent=35 // pred_region
          %318 = dma.done %s311, 1536
        $region40: #{tpu_custom_call.1} parent=35 // pred_fallthru
          _
        %s319 = sand.u32 %s59, 1
        %s320 = scalar_lea.sflag [#allocation5], %s319
        %s321 = sand.u32 %s59, 1
        %s322 = smul.addr %s321, 96
        %s323 = scalar_lea.vmem [#allocation4], %s322
        %p324 = pneg %p72
        %p325 = pneg %p69
        %p326 = pneg %p93
        %p327 = pneg %p90
        %p328 = pneg %p114
        %p329 = pneg %p111
        %p330 = pneg %p135
        %p331 = pneg %p132
        %p332 = pneg %p165
        %p333 = pneg %p162
        %s334 = sand.u32 %s152, 1
        %s335 = scalar_lea.sflag [#allocation6], %s334
        %s336 = sand.u32 %s152, 1
        %s337 = smul.addr %s336, 96
        %s338 = scalar_lea.vmem [#allocation7], %s337
        %p339 = pneg %p195
        %p340 = pneg %p192
        %s341 = sand.u32 %s182, 1
        %s342 = scalar_lea.sflag [#allocation9], %s341
        %s343 = sand.u32 %s182, 1
        %s344 = smul.addr %s343, 3
        %s345 = scalar_lea.vmem [#allocation8], %s344
        %p346 = pneg %p223
        %p347 = pneg %p220
        %s348 = sadd.s32 %s33, %s34
        %p349 = scmp.lt.s32.totalorder %s348, 1
        %s350 = scalar_select %p349, %s348, 1
        %s351 = scalar_lea.vmem %s6, %s350
        %p352 = pneg %p251
        %p353 = pneg %p248
        %s354 = sadd.s32 %s33, %s34
        %p355 = scmp.lt.s32.totalorder %s354, 1
        %s356 = scalar_select %p355, %s354, 1
        %s357 = smul.addr %s356, 8
        %s358 = smul.addr %s357, 8
        %s359 = scalar_lea.vmem %s7, %s358
        %s360 = sadd.s32 %s34, %s35
        %s361 = smul.u32 3, %s360
        %s362 = sadd.s32 %s34, %s35
        %s363 = smul.u32 3, %s362
        %s364 = sadd.s32 %s34, %s35
        %s365 = smul.u32 3, %s364
        %s366 = sadd.s32 %s33, %s34
        %p367 = scmp.lt.s32.totalorder %s366, 1
        %s368 = scalar_select %p367, %s366, 1
        %s369 = scalar_lea.vmem %s6, %s368
        %s370 = sadd.s32 %s33, %s34
        %s371 = sadd.s32 %s33, %s34
        %p372 = scmp.lt.s32.totalorder %s371, 1
        %s373 = scalar_select %p372, %s371, 1
        %s374 = smul.addr %s373, 8
        %s375 = smul.addr %s374, 8
        %s376 = scalar_lea.vmem %s7, %s375
        %s377 = sadd.s32 %s33, %s34
        %p378 = scmp.eq.s32.totalorder %s35, 0
        // Predicated region
        $region41: #{tpu_custom_call.1} parent=35 // pred_check
          %p379 = pneg %p378
        $region42: #{tpu_custom_call.1} parent=35 // pred_check_branch
          %381 = sbr.rel (%p379) target = $region44
        $region43: #{tpu_custom_call.1} parent=35 // pred_region
          %382 = vst [vmem:[#allocation2] sm:$0xff] 0.0
          %383 = vst [vmem:[#allocation2 + $0x8] sm:$0xff] 0.0
          %384 = vst [vmem:[#allocation2 + $0x10] sm:$0xff] 0.0
          %385 = vst [vmem:[#allocation2 + $0x18] sm:$0xff] 0.0
          %386 = vst [vmem:[#allocation3] sm:$0xff] 0.0
          %387 = vst [vmem:[#allocation3 + $0x8] sm:$0xff] 0.0
          %388 = vst [vmem:[#allocation3 + $0x10] sm:$0xff] 0.0
          %389 = vst [vmem:[#allocation3 + $0x18] sm:$0xff] 0.0
          %390 = vst [vmem:[#allocation3 + $0x20] sm:$0xff] 0.0
          %391 = vst [vmem:[#allocation3 + $0x28] sm:$0xff] 0.0
          %392 = vst [vmem:[#allocation3 + $0x30] sm:$0xff] 0.0
          %393 = vst [vmem:[#allocation3 + $0x38] sm:$0xff] 0.0
        $region44: #{tpu_custom_call.1} parent=35 // pred_fallthru
          _
        %v394 = vld [vmem:[%s314] sm:$0xff]
        %v395 = vld [vmem:[%s314 + $0x8] sm:$0xff]
        %v396 = vld [vmem:[%s314 + $0x10] sm:$0xff]
        %v397 = vld [vmem:[%s314 + $0x18] sm:$0xff]
        %v398 = vld [vmem:[%s314 + $0x20] sm:$0xff]
        %v399 = vld [vmem:[%s314 + $0x28] sm:$0xff]
        %v400 = vld [vmem:[%s314 + $0x30] sm:$0xff]
        %v401 = vld [vmem:[%s314 + $0x38] sm:$0xff]
        %v402 = vld [vmem:[%s314 + $0x40] sm:$0xff]
        %v403 = vld [vmem:[%s314 + $0x48] sm:$0xff]
        %v404 = vld [vmem:[%s314 + $0x50] sm:$0xff]
        %v405 = vld [vmem:[%s314 + $0x58] sm:$0xff]
        %v406 = vld [vmem:[%s1] sm:$0xff]
        %v407 = vld [vmem:[%s1 + $0x8] sm:$0xff]
        %v408 = vld [vmem:[%s1 + $0x10] sm:$0xff]
        %v409 = vld [vmem:[%s1 + $0x18] sm:$0xff]
        %v410 = vld [vmem:[%s1 + $0x20] sm:$0xff]
        %v411 = vld [vmem:[%s1 + $0x28] sm:$0xff]
        %v412 = vld [vmem:[%s1 + $0x30] sm:$0xff]
        %v413 = vld [vmem:[%s1 + $0x38] sm:$0xff]
        %v414 = vld [vmem:[%s2] sm:$0xff]
        %v415 = vld [vmem:[%s2 + $0x8] sm:$0xff]
        %v416 = vld [vmem:[%s2 + $0x10] sm:$0xff]
        %v417 = vld [vmem:[%s2 + $0x18] sm:$0xff]
        %v418 = vld [vmem:[%s3] sm:$0xff]
        %v419 = vld [vmem:[%s3 + $0x8] sm:$0xff]
        %v420 = vld [vmem:[%s3 + $0x10] sm:$0xff]
        %v421 = vld [vmem:[%s3 + $0x18] sm:$0xff]
        %v422 = vld [vmem:[%s3 + $0x20] sm:$0xff]
        %v423 = vld [vmem:[%s3 + $0x28] sm:$0xff]
        %v424 = vld [vmem:[%s3 + $0x30] sm:$0xff]
        %v425 = vld [vmem:[%s3 + $0x38] sm:$0xff]
        %vm426 = vcmask 261120
        %v428 = vsel %vm426, %v406, 0
        %v431 = vsel %vm426, %v407, 0
        %v434 = vsel %vm426, %v408, 0
        %v437 = vsel %vm426, %v409, 0
        %v440 = vsel %vm426, %v410, 0
        %v443 = vsel %vm426, %v411, 0
        %v446 = vsel %vm426, %v412, 0
        %v449 = vsel %vm426, %v413, 0
        %451 = vmatprep.subr.mxu0 0.0
        %452 = vmatpush1.msra.mxu0 0.0
        %453 = vmatprep.subr.mxu0 0.0
        %454 = vmatpush1.msra.mxu0 0.0
        %455 = vmatprep.subr.mxu0 0.0
        %456 = vmatpush1.msra.mxu0 0.0
        %457 = vmatprep.subr.mxu0 0.0
        %458 = vmatpush1.msra.mxu0 0.0
        %459 = vmatprep.subr.mxu0 0.0
        %460 = vmatpush1.msra.mxu0 0.0
        %461 = vmatprep.subr.mxu0 0.0
        %462 = vmatpush1.msra.mxu0 0.0
        %463 = vmatprep.subr.mxu0 0.0
        %464 = vmatpush1.msra.mxu0 0.0
        %465 = vmatprep.subr.mxu0 0.0
        %466 = vmatpush1.msra.mxu0 0.0
        %467 = vmatprep.subr.mxu0 0.0
        %468 = vmatpush1.msra.mxu0 0.0
        %469 = vmatprep.subr.mxu0 0.0
        %470 = vmatpush1.msra.mxu0 0.0
        %471 = vmatprep.subr.mxu0 0.0
        %472 = vmatpush1.msra.mxu0 0.0
        %473 = vmatprep.subr.mxu0 0.0
        %474 = vmatpush1.msra.mxu0 0.0
        %475 = vmatprep.subr.mxu0 %v404
        %476 = vmatpush1.msra.mxu0 %v403
        %477 = vmatprep.subr.mxu0 %v401
        %478 = vmatpush1.msra.mxu0 %v400
        %479 = vmatprep.subr.mxu0 %v398
        %480 = vmatpush1.msra.mxu0 %v397
        %481 = vmatprep.subr.mxu0 %v395
        %482 = vmatpush1.msra.mxu0 %v394
        %483 = vmatprep.subr.mxu0 0.0
        %484 = vmatpush2.msra.mxu0 0.0
        %485 = vmatprep.subr.mxu0 0.0
        %486 = vmatpush2.msra.mxu0 0.0
        %487 = vmatprep.subr.mxu0 0.0
        %488 = vmatpush2.msra.mxu0 0.0
        %489 = vmatprep.subr.mxu0 0.0
        %490 = vmatpush2.msra.mxu0 0.0
        %491 = vmatprep.subr.mxu0 0.0
        %492 = vmatpush2.msra.mxu0 0.0
        %493 = vmatprep.subr.mxu0 0.0
        %494 = vmatpush2.msra.mxu0 0.0
        %495 = vmatprep.subr.mxu0 0.0
        %496 = vmatpush2.msra.mxu0 0.0
        %497 = vmatprep.subr.mxu0 0.0
        %498 = vmatpush2.msra.mxu0 0.0
        %499 = vmatprep.subr.mxu0 0.0
        %500 = vmatpush2.msra.mxu0 0.0
        %501 = vmatprep.subr.mxu0 0.0
        %502 = vmatpush2.msra.mxu0 0.0
        %503 = vmatprep.subr.mxu0 0.0
        %504 = vmatpush2.msra.mxu0 0.0
        %505 = vmatprep.subr.mxu0 0.0
        %506 = vmatpush2.msra.mxu0 0.0
        %507 = vmatprep.subr.mxu0 0.0
        %508 = vmatpush2.msra.mxu0 0.0
        %509 = vmatprep.subr.mxu0 0.0
        %510 = vmatpush2.msra.mxu0 0.0
        %511 = vmatprep.subr.mxu0 0.0
        %512 = vmatpush2.msra.mxu0 0.0
        %513 = vmatprep.subr.mxu0 0.0
        %514 = vmatpush2.msra.mxu0 0.0
        %515 = vmatprep.mubr.f32.mxu0 0.0
        %516 = vmatmul.mubr.f32.gmra.mxu0 %v428
        %v517 = vpop.f32.mrf.mxu0
        %v518 = vadd.f32 0.0, %v517
        %v519 = vpop.f32.mrf.mxu0
        %v520 = vadd.f32 0.0, %v519
        %521 = vmatprep.mubr.f32.mxu0 0.0
        %522 = vmatmul.mubr.f32.gmra.mxu0 %v431
        %v523 = vpop.f32.mrf.mxu0
        %v524 = vadd.f32 0.0, %v523
        %v525 = vpop.f32.mrf.mxu0
        %v526 = vadd.f32 0.0, %v525
        %527 = vmatprep.mubr.f32.mxu0 0.0
        %528 = vmatmul.mubr.f32.gmra.mxu0 %v434
        %v529 = vpop.f32.mrf.mxu0
        %v530 = vadd.f32 0.0, %v529
        %v531 = vpop.f32.mrf.mxu0
        %v532 = vadd.f32 0.0, %v531
        %533 = vmatprep.mubr.f32.mxu0 0.0
        %534 = vmatmul.mubr.f32.gmra.mxu0 %v437
        %v535 = vpop.f32.mrf.mxu0
        %v536 = vadd.f32 0.0, %v535
        %v537 = vpop.f32.mrf.mxu0
        %v538 = vadd.f32 0.0, %v537
        %539 = vmatprep.mubr.f32.mxu0 0.0
        %540 = vmatmul.mubr.f32.gmra.mxu0 %v440
        %v541 = vpop.f32.mrf.mxu0
        %v542 = vadd.f32 0.0, %v541
        %v543 = vpop.f32.mrf.mxu0
        %v544 = vadd.f32 0.0, %v543
        %545 = vmatprep.mubr.f32.mxu0 0.0
        %546 = vmatmul.mubr.f32.gmra.mxu0 %v443
        %v547 = vpop.f32.mrf.mxu0
        %v548 = vadd.f32 0.0, %v547
        %v549 = vpop.f32.mrf.mxu0
        %v550 = vadd.f32 0.0, %v549
        %551 = vmatprep.mubr.f32.mxu0 0.0
        %552 = vmatmul.mubr.f32.gmra.mxu0 %v446
        %v553 = vpop.f32.mrf.mxu0
        %v554 = vadd.f32 0.0, %v553
        %v555 = vpop.f32.mrf.mxu0
        %v556 = vadd.f32 0.0, %v555
        %557 = vmatprep.mubr.f32.mxu0 0.0
        %558 = vmatmul.mubr.f32.gmra.mxu0 %v449
        %v559 = vpop.f32.mrf.mxu0
        %v560 = vadd.f32 0.0, %v559
        %v561 = vpop.f32.mrf.mxu0
        %v562 = vadd.f32 0.0, %v561
        %563 = vdwg.mxu0
        %564 = vmatprep.subr.mxu0 0.0
        %565 = vmatpush1.msra.mxu0 0.0
        %566 = vmatprep.subr.mxu0 0.0
        %567 = vmatpush1.msra.mxu0 0.0
        %568 = vmatprep.subr.mxu0 0.0
        %569 = vmatpush1.msra.mxu0 0.0
        %570 = vmatprep.subr.mxu0 0.0
        %571 = vmatpush1.msra.mxu0 0.0
        %572 = vmatprep.subr.mxu0 0.0
        %573 = vmatpush1.msra.mxu0 0.0
        %574 = vmatprep.subr.mxu0 0.0
        %575 = vmatpush1.msra.mxu0 0.0
        %576 = vmatprep.subr.mxu0 0.0
        %577 = vmatpush1.msra.mxu0 0.0
        %578 = vmatprep.subr.mxu0 0.0
        %579 = vmatpush1.msra.mxu0 0.0
        %580 = vmatprep.subr.mxu0 0.0
        %581 = vmatpush1.msra.mxu0 0.0
        %582 = vmatprep.subr.mxu0 0.0
        %583 = vmatpush1.msra.mxu0 0.0
        %584 = vmatprep.subr.mxu0 0.0
        %585 = vmatpush1.msra.mxu0 0.0
        %586 = vmatprep.subr.mxu0 0.0
        %587 = vmatpush1.msra.mxu0 0.0
        %588 = vmatprep.subr.mxu0 0.0
        %589 = vmatpush1.msra.mxu0 %v405
        %590 = vmatprep.subr.mxu0 0.0
        %591 = vmatpush1.msra.mxu0 %v402
        %592 = vmatprep.subr.mxu0 0.0
        %593 = vmatpush1.msra.mxu0 %v399
        %594 = vmatprep.subr.mxu0 0.0
        %595 = vmatpush1.msra.mxu0 %v396
        %596 = vmatprep.subr.mxu0 0.0
        %597 = vmatpush2.msra.mxu0 0.0
        %598 = vmatprep.subr.mxu0 0.0
        %599 = vmatpush2.msra.mxu0 0.0
        %600 = vmatprep.subr.mxu0 0.0
        %601 = vmatpush2.msra.mxu0 0.0
        %602 = vmatprep.subr.mxu0 0.0
        %603 = vmatpush2.msra.mxu0 0.0
        %604 = vmatprep.subr.mxu0 0.0
        %605 = vmatpush2.msra.mxu0 0.0
        %606 = vmatprep.subr.mxu0 0.0
        %607 = vmatpush2.msra.mxu0 0.0
        %608 = vmatprep.subr.mxu0 0.0
        %609 = vmatpush2.msra.mxu0 0.0
        %610 = vmatprep.subr.mxu0 0.0
        %611 = vmatpush2.msra.mxu0 0.0
        %612 = vmatprep.subr.mxu0 0.0
        %613 = vmatpush2.msra.mxu0 0.0
        %614 = vmatprep.subr.mxu0 0.0
        %615 = vmatpush2.msra.mxu0 0.0
        %616 = vmatprep.subr.mxu0 0.0
        %617 = vmatpush2.msra.mxu0 0.0
        %618 = vmatprep.subr.mxu0 0.0
        %619 = vmatpush2.msra.mxu0 0.0
        %620 = vmatprep.subr.mxu0 0.0
        %621 = vmatpush2.msra.mxu0 0.0
        %622 = vmatprep.subr.mxu0 0.0
        %623 = vmatpush2.msra.mxu0 0.0
        %624 = vmatprep.subr.mxu0 0.0
        %625 = vmatpush2.msra.mxu0 0.0
        %626 = vmatprep.subr.mxu0 0.0
        %627 = vmatpush2.msra.mxu0 0.0
        %628 = vmatprep.mubr.f32.mxu0 0.0
        %629 = vmatmul.mubr.f32.gmra.mxu0 %v428
        %v630 = vpop.f32.mrf.mxu0
        %v631 = vadd.f32 0.0, %v630
        %v632 = vpop.f32.mrf.mxu0
        %633 = vmatprep.mubr.f32.mxu0 0.0
        %634 = vmatmul.mubr.f32.gmra.mxu0 %v431
        %v635 = vpop.f32.mrf.mxu0
        %v636 = vadd.f32 0.0, %v635
        %v637 = vpop.f32.mrf.mxu0
        %638 = vmatprep.mubr.f32.mxu0 0.0
        %639 = vmatmul.mubr.f32.gmra.mxu0 %v434
        %v640 = vpop.f32.mrf.mxu0
        %v641 = vadd.f32 0.0, %v640
        %v642 = vpop.f32.mrf.mxu0
        %643 = vmatprep.mubr.f32.mxu0 0.0
        %644 = vmatmul.mubr.f32.gmra.mxu0 %v437
        %v645 = vpop.f32.mrf.mxu0
        %v646 = vadd.f32 0.0, %v645
        %v647 = vpop.f32.mrf.mxu0
        %648 = vmatprep.mubr.f32.mxu0 0.0
        %649 = vmatmul.mubr.f32.gmra.mxu0 %v440
        %v650 = vpop.f32.mrf.mxu0
        %v651 = vadd.f32 0.0, %v650
        %v652 = vpop.f32.mrf.mxu0
        %653 = vmatprep.mubr.f32.mxu0 0.0
        %654 = vmatmul.mubr.f32.gmra.mxu0 %v443
        %v655 = vpop.f32.mrf.mxu0
        %v656 = vadd.f32 0.0, %v655
        %v657 = vpop.f32.mrf.mxu0
        %658 = vmatprep.mubr.f32.mxu0 0.0
        %659 = vmatmul.mubr.f32.gmra.mxu0 %v446
        %v660 = vpop.f32.mrf.mxu0
        %v661 = vadd.f32 0.0, %v660
        %v662 = vpop.f32.mrf.mxu0
        %663 = vmatprep.mubr.f32.mxu0 0.0
        %664 = vmatmul.mubr.f32.gmra.mxu0 %v449
        %v665 = vpop.f32.mrf.mxu0
        %v666 = vadd.f32 0.0, %v665
        %v667 = vpop.f32.mrf.mxu0
        %668 = vdwg.mxu0
        %670 = vset.pattern.permute.xlu0 0
        %671 = vperm.xlu0 %670, %v418
        %v672 = vpop.permute.xlu0 %671
        %675 = vset.pattern.permute.xlu0 0
        %676 = vperm.xlu0 %675, %v419
        %v677 = vpop.permute.xlu0 %676
        %680 = vset.pattern.permute.xlu0 0
        %681 = vperm.xlu0 %680, %v420
        %v682 = vpop.permute.xlu0 %681
        %685 = vset.pattern.permute.xlu0 0
        %686 = vperm.xlu0 %685, %v421
        %v687 = vpop.permute.xlu0 %686
        %690 = vset.pattern.permute.xlu0 0
        %691 = vperm.xlu0 %690, %v422
        %v692 = vpop.permute.xlu0 %691
        %695 = vset.pattern.permute.xlu0 0
        %696 = vperm.xlu0 %695, %v423
        %v697 = vpop.permute.xlu0 %696
        %700 = vset.pattern.permute.xlu0 0
        %701 = vperm.xlu0 %700, %v424
        %v702 = vpop.permute.xlu0 %701
        %705 = vset.pattern.permute.xlu0 0
        %706 = vperm.xlu0 %705, %v425
        %v707 = vpop.permute.xlu0 %706
        %v709 = vsub.f32 %v672, %v518
        %v710 = vsub.f32 %v672, %v520
        %v711 = vsub.f32 %v672, %v631
        %v712 = vsub.f32 %v677, %v524
        %v713 = vsub.f32 %v677, %v526
        %v714 = vsub.f32 %v677, %v636
        %v715 = vsub.f32 %v682, %v530
        %v716 = vsub.f32 %v682, %v532
        %v717 = vsub.f32 %v682, %v641
        %v718 = vsub.f32 %v687, %v536
        %v719 = vsub.f32 %v687, %v538
        %v720 = vsub.f32 %v687, %v646
        %v721 = vsub.f32 %v692, %v542
        %v722 = vsub.f32 %v692, %v544
        %v723 = vsub.f32 %v692, %v651
        %v724 = vsub.f32 %v697, %v548
        %v725 = vsub.f32 %v697, %v550
        %v726 = vsub.f32 %v697, %v656
        %v727 = vsub.f32 %v702, %v554
        %v728 = vsub.f32 %v702, %v556
        %v729 = vsub.f32 %v702, %v661
        %v730 = vsub.f32 %v707, %v560
        %v731 = vsub.f32 %v707, %v562
        %v732 = vsub.f32 %v707, %v666
        %v733 = vmin.f32 %v709, %v715
        %v734 = vmin.f32 %v712, %v718
        %v735 = vmin.f32 %v733, %v721
        %v736 = vmin.f32 %v734, %v724
        %v737 = vmin.f32 %v735, %v727
        %v738 = vmin.f32 %v736, %v730
        %v739 = vmin.f32 %v737, %v738
        %v740 = vrot.slane %v739, 4
        %v741 = vmin.f32 %v739, %v740
        %v742 = vrot.slane %v741, 2
        %v743 = vmin.f32 %v741, %v742
        %v744 = vrot.slane %v743, 1
        %v745 = vmin.f32 %v743, %v744
        %v746 = vmin.f32 %v710, %v716
        %v747 = vmin.f32 %v713, %v719
        %v748 = vmin.f32 %v746, %v722
        %v749 = vmin.f32 %v747, %v725
        %v750 = vmin.f32 %v748, %v728
        %v751 = vmin.f32 %v749, %v731
        %v752 = vmin.f32 %v750, %v751
        %v753 = vrot.slane %v752, 4
        %v754 = vmin.f32 %v752, %v753
        %v755 = vrot.slane %v754, 2
        %v756 = vmin.f32 %v754, %v755
        %v757 = vrot.slane %v756, 1
        %v758 = vmin.f32 %v756, %v757
        %vm759 = vcmask 523264
        %v760 = vsel %vm759, %v711, inf
        %v761 = vsel %vm759, %v714, inf
        %v762 = vsel %vm759, %v717, inf
        %v763 = vmin.f32 %v760, %v762
        %v764 = vsel %vm759, %v720, inf
        %v765 = vmin.f32 %v761, %v764
        %v766 = vsel %vm759, %v723, inf
        %v767 = vmin.f32 %v763, %v766
        %v768 = vsel %vm759, %v726, inf
        %v769 = vmin.f32 %v765, %v768
        %v770 = vsel %vm759, %v729, inf
        %v771 = vmin.f32 %v767, %v770
        %v772 = vsel %vm759, %v732, inf
        %v773 = vmin.f32 %v769, %v772
        %v774 = vmin.f32 %v771, %v773
        %v775 = vrot.slane %v774, 4
        %v776 = vmin.f32 %v774, %v775
        %v777 = vrot.slane %v776, 2
        %v778 = vmin.f32 %v776, %v777
        %v779 = vrot.slane %v778, 1
        %v780 = vmin.f32 %v778, %v779
        %v781 = vlaneseq
        %v782 = vshrl.u32 %v781, 7
        %v783 = vadd.s32 %v782, 8
        %v784 = vadd.s32 %v782, 16
        %v785 = vadd.s32 %v782, 24
        %v786 = vadd.s32 %v782, 32
        %v787 = vadd.s32 %v782, 40
        %v788 = vadd.s32 %v782, 48
        %v789 = vadd.s32 %v782, 56
        %vm790 = vcmp.le.f32.partialorder %v709, %v745
        %vm791 = vcmp.le.f32.partialorder %v710, %v758
        %vm792 = vcmp.le.f32.partialorder %v711, %v780
        %vm793 = vcmp.le.f32.partialorder %v712, %v745
        %vm794 = vcmp.le.f32.partialorder %v713, %v758
        %vm795 = vcmp.le.f32.partialorder %v714, %v780
        %vm796 = vcmp.le.f32.partialorder %v715, %v745
        %vm797 = vcmp.le.f32.partialorder %v716, %v758
        %vm798 = vcmp.le.f32.partialorder %v717, %v780
        %vm799 = vcmp.le.f32.partialorder %v718, %v745
        %vm800 = vcmp.le.f32.partialorder %v719, %v758
        %vm801 = vcmp.le.f32.partialorder %v720, %v780
        %vm802 = vcmp.le.f32.partialorder %v721, %v745
        %vm803 = vcmp.le.f32.partialorder %v722, %v758
        %vm804 = vcmp.le.f32.partialorder %v723, %v780
        %vm805 = vcmp.le.f32.partialorder %v724, %v745
        %vm806 = vcmp.le.f32.partialorder %v725, %v758
        %vm807 = vcmp.le.f32.partialorder %v726, %v780
        %vm808 = vcmp.le.f32.partialorder %v727, %v745
        %vm809 = vcmp.le.f32.partialorder %v728, %v758
        %vm810 = vcmp.le.f32.partialorder %v729, %v780
        %vm811 = vcmp.le.f32.partialorder %v730, %v745
        %vm812 = vcmp.le.f32.partialorder %v731, %v758
        %vm813 = vcmp.le.f32.partialorder %v732, %v780
        %v814 = vsel %vm790, %v782, 64
        %v815 = vsel %vm791, %v782, 64
        %v816 = vsel %vm792, %v782, 64
        %v817 = vsel %vm793, %v783, 64
        %v818 = vsel %vm794, %v783, 64
        %v819 = vsel %vm795, %v783, 64
        %v820 = vsel %vm796, %v784, 64
        %v821 = vsel %vm797, %v784, 64
        %v822 = vsel %vm798, %v784, 64
        %v823 = vsel %vm799, %v785, 64
        %v824 = vsel %vm800, %v785, 64
        %v825 = vsel %vm801, %v785, 64
        %v826 = vsel %vm802, %v786, 64
        %v827 = vsel %vm803, %v786, 64
        %v828 = vsel %vm804, %v786, 64
        %v829 = vsel %vm805, %v787, 64
        %v830 = vsel %vm806, %v787, 64
        %v831 = vsel %vm807, %v787, 64
        %v832 = vsel %vm808, %v788, 64
        %v833 = vsel %vm809, %v788, 64
        %v834 = vsel %vm810, %v788, 64
        %v835 = vsel %vm811, %v789, 64
        %v836 = vsel %vm812, %v789, 64
        %v837 = vsel %vm813, %v789, 64
        %vm838 = vcmp.lt.s32.totalorder %v814, %v820
        %v839 = vsel %vm838, %v814, %v820
        %vm840 = vcmp.lt.s32.totalorder %v817, %v823
        %v841 = vsel %vm840, %v817, %v823
        %vm842 = vcmp.lt.s32.totalorder %v839, %v826
        %v843 = vsel %vm842, %v839, %v826
        %vm844 = vcmp.lt.s32.totalorder %v841, %v829
        %v845 = vsel %vm844, %v841, %v829
        %vm846 = vcmp.lt.s32.totalorder %v843, %v832
        %v847 = vsel %vm846, %v843, %v832
        %vm848 = vcmp.lt.s32.totalorder %v845, %v835
        %v849 = vsel %vm848, %v845, %v835
        %vm850 = vcmp.lt.s32.totalorder %v847, %v849
        %v851 = vsel %vm850, %v847, %v849
        %v852 = vrot.slane %v851, 4
        %vm853 = vcmp.lt.s32.totalorder %v851, %v852
        %v854 = vsel %vm853, %v851, %v852
        %v855 = vrot.slane %v854, 2
        %vm856 = vcmp.lt.s32.totalorder %v854, %v855
        %v857 = vsel %vm856, %v854, %v855
        %v858 = vrot.slane %v857, 1
        %vm859 = vcmp.lt.s32.totalorder %v857, %v858
        %v860 = vsel %vm859, %v857, %v858
        %vm861 = vcmp.lt.s32.totalorder %v815, %v821
        %v862 = vsel %vm861, %v815, %v821
        %vm863 = vcmp.lt.s32.totalorder %v818, %v824
        %v864 = vsel %vm863, %v818, %v824
        %vm865 = vcmp.lt.s32.totalorder %v862, %v827
        %v866 = vsel %vm865, %v862, %v827
        %vm867 = vcmp.lt.s32.totalorder %v864, %v830
        %v868 = vsel %vm867, %v864, %v830
        %vm869 = vcmp.lt.s32.totalorder %v866, %v833
        %v870 = vsel %vm869, %v866, %v833
        %vm871 = vcmp.lt.s32.totalorder %v868, %v836
        %v872 = vsel %vm871, %v868, %v836
        %vm873 = vcmp.lt.s32.totalorder %v870, %v872
        %v874 = vsel %vm873, %v870, %v872
        %v875 = vrot.slane %v874, 4
        %vm876 = vcmp.lt.s32.totalorder %v874, %v875
        %v877 = vsel %vm876, %v874, %v875
        %v878 = vrot.slane %v877, 2
        %vm879 = vcmp.lt.s32.totalorder %v877, %v878
        %v880 = vsel %vm879, %v877, %v878
        %v881 = vrot.slane %v880, 1
        %vm882 = vcmp.lt.s32.totalorder %v880, %v881
        %v883 = vsel %vm882, %v880, %v881
        %v884 = vsel %vm759, %v816, 2147483647
        %v885 = vsel %vm759, %v819, 2147483647
        %v886 = vsel %vm759, %v822, 2147483647
        %vm887 = vcmp.lt.s32.totalorder %v884, %v886
        %v888 = vsel %vm887, %v884, %v886
        %v889 = vsel %vm759, %v825, 2147483647
        %vm890 = vcmp.lt.s32.totalorder %v885, %v889
        %v891 = vsel %vm890, %v885, %v889
        %v892 = vsel %vm759, %v828, 2147483647
        %vm893 = vcmp.lt.s32.totalorder %v888, %v892
        %v894 = vsel %vm893, %v888, %v892
        %v895 = vsel %vm759, %v831, 2147483647
        %vm896 = vcmp.lt.s32.totalorder %v891, %v895
        %v897 = vsel %vm896, %v891, %v895
        %v898 = vsel %vm759, %v834, 2147483647
        %vm899 = vcmp.lt.s32.totalorder %v894, %v898
        %v900 = vsel %vm899, %v894, %v898
        %v901 = vsel %vm759, %v837, 2147483647
        %vm902 = vcmp.lt.s32.totalorder %v897, %v901
        %v903 = vsel %vm902, %v897, %v901
        %vm904 = vcmp.lt.s32.totalorder %v900, %v903
        %v905 = vsel %vm904, %v900, %v903
        %v906 = vrot.slane %v905, 4
        %vm907 = vcmp.lt.s32.totalorder %v905, %v906
        %v908 = vsel %vm907, %v905, %v906
        %v909 = vrot.slane %v908, 2
        %vm910 = vcmp.lt.s32.totalorder %v908, %v909
        %v911 = vsel %vm910, %v908, %v909
        %v912 = vrot.slane %v911, 1
        %vm913 = vcmp.lt.s32.totalorder %v911, %v912
        %v914 = vsel %vm913, %v911, %v912
        %v915 = vcombine.low %v860, %v883
        %v917 = vunpack.c.l.s4 1966171168
        %v918 = vunpack.c.0.s8 %v917
        %v919 = vlaneseq
        %v920 = vshrl.u32 %v919, 7
        %v921 = vsub.s32 %v918, %v920
        %v922 = vrot.slane %v915, %v921
        %v924 = vunpack.c.l.s4 1966171168
        %v925 = vunpack.c.0.s8 %v924
        %v926 = vlaneseq
        %v927 = vshrl.u32 %v926, 7
        %v928 = vsub.s32 %v925, %v927
        %v929 = vrot.slane %v914, %v928
        %v930 = vcombine.low %v922, %v929
        %v932 = vunpack.c.l.s4 1966171168
        %v933 = vunpack.c.0.s8 %v932
        %v934 = vlaneseq
        %v935 = vshrl.u32 %v934, 7
        %v936 = vsub.s32 %v933, %v935
        %v937 = vrot.slane %v930, %v936
        %v938 = vlaneseq
        %vm939 = vcmp.ge.s32.totalorder %v938, 0
        %vm940 = vcmp.lt.s32.totalorder %v938, 320
        %vm941 = vmand %vm939, %vm940
        %942 = vst.msk [vmem:[%s345] sm:$0x7] %vm941, %v937
        %vm943 = vcmp.eq.s32.totalorder %v782, %v860
        %vm944 = vcmp.eq.s32.totalorder %v782, %v883
        %vm945 = vcmp.eq.s32.totalorder %v782, %v914
        %vm946 = vcmp.eq.s32.totalorder %v783, %v860
        %vm947 = vcmp.eq.s32.totalorder %v783, %v883
        %vm948 = vcmp.eq.s32.totalorder %v783, %v914
        %vm949 = vcmp.eq.s32.totalorder %v784, %v860
        %vm950 = vcmp.eq.s32.totalorder %v784, %v883
        %vm951 = vcmp.eq.s32.totalorder %v784, %v914
        %vm952 = vcmp.eq.s32.totalorder %v785, %v860
        %vm953 = vcmp.eq.s32.totalorder %v785, %v883
        %vm954 = vcmp.eq.s32.totalorder %v785, %v914
        %vm955 = vcmp.eq.s32.totalorder %v786, %v860
        %vm956 = vcmp.eq.s32.totalorder %v786, %v883
        %vm957 = vcmp.eq.s32.totalorder %v786, %v914
        %vm958 = vcmp.eq.s32.totalorder %v787, %v860
        %vm959 = vcmp.eq.s32.totalorder %v787, %v883
        %vm960 = vcmp.eq.s32.totalorder %v787, %v914
        %vm961 = vcmp.eq.s32.totalorder %v788, %v860
        %vm962 = vcmp.eq.s32.totalorder %v788, %v883
        %vm963 = vcmp.eq.s32.totalorder %v788, %v914
        %vm964 = vcmp.eq.s32.totalorder %v789, %v860
        %vm965 = vcmp.eq.s32.totalorder %v789, %v883
        %vm966 = vcmp.eq.s32.totalorder %v789, %v914
        %v967 = vsel %vm943, 1, 0
        %v968 = vsel %vm944, 1, 0
        %v969 = vsel %vm945, 1, 0
        %v970 = vsel %vm946, 1, 0
        %v971 = vsel %vm947, 1, 0
        %v972 = vsel %vm948, 1, 0
        %v973 = vsel %vm949, 1, 0
        %v974 = vsel %vm950, 1, 0
        %v975 = vsel %vm951, 1, 0
        %v976 = vsel %vm952, 1, 0
        %v977 = vsel %vm953, 1, 0
        %v978 = vsel %vm954, 1, 0
        %v979 = vsel %vm955, 1, 0
        %v980 = vsel %vm956, 1, 0
        %v981 = vsel %vm957, 1, 0
        %v982 = vsel %vm958, 1, 0
        %v983 = vsel %vm959, 1, 0
        %v984 = vsel %vm960, 1, 0
        %v985 = vsel %vm961, 1, 0
        %v986 = vsel %vm962, 1, 0
        %v987 = vsel %vm963, 1, 0
        %v988 = vsel %vm964, 1, 0
        %v989 = vsel %vm965, 1, 0
        %v990 = vsel %vm966, 1, 0
        %v991 = vcvt.s32.f32 %v967
        %v992 = vcvt.s32.f32 %v968
        %v993 = vcvt.s32.f32 %v969
        %v994 = vcvt.s32.f32 %v970
        %v995 = vcvt.s32.f32 %v971
        %v996 = vcvt.s32.f32 %v972
        %v997 = vcvt.s32.f32 %v973
        %v998 = vcvt.s32.f32 %v974
        %v999 = vcvt.s32.f32 %v975
        %v1000 = vcvt.s32.f32 %v976
        %v1001 = vcvt.s32.f32 %v977
        %v1002 = vcvt.s32.f32 %v978
        %v1003 = vcvt.s32.f32 %v979
        %v1004 = vcvt.s32.f32 %v980
        %v1005 = vcvt.s32.f32 %v981
        %v1006 = vcvt.s32.f32 %v982
        %v1007 = vcvt.s32.f32 %v983
        %v1008 = vcvt.s32.f32 %v984
        %v1009 = vcvt.s32.f32 %v985
        %v1010 = vcvt.s32.f32 %v986
        %v1011 = vcvt.s32.f32 %v987
        %v1012 = vcvt.s32.f32 %v988
        %v1013 = vcvt.s32.f32 %v989
        %v1014 = vcvt.s32.f32 %v990
        %v1016 = vsel %vm759, %v414, 0
        %v1019 = vsel %vm759, %v415, 0
        %v1022 = vsel %vm759, %v416, 0
        %v1025 = vsel %vm759, %v417, 0
        %1027 = vmatprep.subr.mxu0 0.0
        %1028 = vmatpush1.msra.mxu0 0.0
        %1029 = vmatprep.subr.mxu0 0.0
        %1030 = vmatpush1.msra.mxu0 0.0
        %1031 = vmatprep.subr.mxu0 0.0
        %1032 = vmatpush1.msra.mxu0 0.0
        %1033 = vmatprep.subr.mxu0 0.0
        %1034 = vmatpush1.msra.mxu0 0.0
        %1035 = vmatprep.subr.mxu0 0.0
        %1036 = vmatpush1.msra.mxu0 0.0
        %1037 = vmatprep.subr.mxu0 0.0
        %1038 = vmatpush1.msra.mxu0 0.0
        %1039 = vmatprep.subr.mxu0 0.0
        %1040 = vmatpush1.msra.mxu0 0.0
        %1041 = vmatprep.subr.mxu0 0.0
        %1042 = vmatpush1.msra.mxu0 0.0
        %1043 = vmatprep.subr.mxu0 %v1013
        %1044 = vmatpush1.msra.mxu0 %v1012
        %1045 = vmatprep.subr.mxu0 %v1010
        %1046 = vmatpush1.msra.mxu0 %v1009
        %1047 = vmatprep.subr.mxu0 %v1007
        %1048 = vmatpush1.msra.mxu0 %v1006
        %1049 = vmatprep.subr.mxu0 %v1004
        %1050 = vmatpush1.msra.mxu0 %v1003
        %1051 = vmatprep.subr.mxu0 %v1001
        %1052 = vmatpush1.msra.mxu0 %v1000
        %1053 = vmatprep.subr.mxu0 %v998
        %1054 = vmatpush1.msra.mxu0 %v997
        %1055 = vmatprep.subr.mxu0 %v995
        %1056 = vmatpush1.msra.mxu0 %v994
        %1057 = vmatprep.subr.mxu0 %v992
        %1058 = vmatpush1.msra.mxu0 %v991
        %1059 = vmatprep.subr.mxu0 0.0
        %1060 = vmatpush2.msra.mxu0 0.0
        %1061 = vmatprep.subr.mxu0 0.0
        %1062 = vmatpush2.msra.mxu0 0.0
        %1063 = vmatprep.subr.mxu0 0.0
        %1064 = vmatpush2.msra.mxu0 0.0
        %1065 = vmatprep.subr.mxu0 0.0
        %1066 = vmatpush2.msra.mxu0 0.0
        %1067 = vmatprep.subr.mxu0 0.0
        %1068 = vmatpush2.msra.mxu0 0.0
        %1069 = vmatprep.subr.mxu0 0.0
        %1070 = vmatpush2.msra.mxu0 0.0
        %1071 = vmatprep.subr.mxu0 0.0
        %1072 = vmatpush2.msra.mxu0 0.0
        %1073 = vmatprep.subr.mxu0 0.0
        %1074 = vmatpush2.msra.mxu0 0.0
        %1075 = vmatprep.subr.mxu0 0.0
        %1076 = vmatpush2.msra.mxu0 0.0
        %1077 = vmatprep.subr.mxu0 0.0
        %1078 = vmatpush2.msra.mxu0 0.0
        %1079 = vmatprep.subr.mxu0 0.0
        %1080 = vmatpush2.msra.mxu0 0.0
        %1081 = vmatprep.subr.mxu0 0.0
        %1082 = vmatpush2.msra.mxu0 0.0
        %1083 = vmatprep.subr.mxu0 0.0
        %1084 = vmatpush2.msra.mxu0 0.0
        %1085 = vmatprep.subr.mxu0 0.0
        %1086 = vmatpush2.msra.mxu0 0.0
        %1087 = vmatprep.subr.mxu0 0.0
        %1088 = vmatpush2.msra.mxu0 0.0
        %1089 = vmatprep.subr.mxu0 0.0
        %1090 = vmatpush2.msra.mxu0 0.0
        %1091 = vmatprep.mubr.f32.mxu0 0.0
        %1092 = vmatmul.mubr.f32.gmra.mxu0 %v1016
        %v1093 = vpop.f32.mrf.mxu0
        %v1094 = vadd.f32 0.0, %v1093
        %v1095 = vpop.f32.mrf.mxu0
        %v1096 = vadd.f32 0.0, %v1095
        %1097 = vmatprep.mubr.f32.mxu0 0.0
        %1098 = vmatmul.mubr.f32.gmra.mxu0 %v1019
        %v1099 = vpop.f32.mrf.mxu0
        %v1100 = vadd.f32 0.0, %v1099
        %v1101 = vpop.f32.mrf.mxu0
        %v1102 = vadd.f32 0.0, %v1101
        %1103 = vmatprep.mubr.f32.mxu0 0.0
        %1104 = vmatmul.mubr.f32.gmra.mxu0 %v1022
        %v1105 = vpop.f32.mrf.mxu0
        %v1106 = vadd.f32 0.0, %v1105
        %v1107 = vpop.f32.mrf.mxu0
        %v1108 = vadd.f32 0.0, %v1107
        %1109 = vmatprep.mubr.f32.mxu0 0.0
        %1110 = vmatmul.mubr.f32.gmra.mxu0 %v1025
        %v1111 = vpop.f32.mrf.mxu0
        %v1112 = vadd.f32 0.0, %v1111
        %v1113 = vpop.f32.mrf.mxu0
        %v1114 = vadd.f32 0.0, %v1113
        %1115 = vdwg.mxu0
        %1116 = vmatprep.subr.mxu0 0.0
        %1117 = vmatpush1.msra.mxu0 0.0
        %1118 = vmatprep.subr.mxu0 0.0
        %1119 = vmatpush1.msra.mxu0 0.0
        %1120 = vmatprep.subr.mxu0 0.0
        %1121 = vmatpush1.msra.mxu0 0.0
        %1122 = vmatprep.subr.mxu0 0.0
        %1123 = vmatpush1.msra.mxu0 0.0
        %1124 = vmatprep.subr.mxu0 0.0
        %1125 = vmatpush1.msra.mxu0 0.0
        %1126 = vmatprep.subr.mxu0 0.0
        %1127 = vmatpush1.msra.mxu0 0.0
        %1128 = vmatprep.subr.mxu0 0.0
        %1129 = vmatpush1.msra.mxu0 0.0
        %1130 = vmatprep.subr.mxu0 0.0
        %1131 = vmatpush1.msra.mxu0 0.0
        %1132 = vmatprep.subr.mxu0 0.0
        %1133 = vmatpush1.msra.mxu0 %v1014
        %1134 = vmatprep.subr.mxu0 0.0
        %1135 = vmatpush1.msra.mxu0 %v1011
        %1136 = vmatprep.subr.mxu0 0.0
        %1137 = vmatpush1.msra.mxu0 %v1008
        %1138 = vmatprep.subr.mxu0 0.0
        %1139 = vmatpush1.msra.mxu0 %v1005
        %1140 = vmatprep.subr.mxu0 0.0
        %1141 = vmatpush1.msra.mxu0 %v1002
        %1142 = vmatprep.subr.mxu0 0.0
        %1143 = vmatpush1.msra.mxu0 %v999
        %1144 = vmatprep.subr.mxu0 0.0
        %1145 = vmatpush1.msra.mxu0 %v996
        %1146 = vmatprep.subr.mxu0 0.0
        %1147 = vmatpush1.msra.mxu0 %v993
        %1148 = vmatprep.subr.mxu0 0.0
        %1149 = vmatpush2.msra.mxu0 0.0
        %1150 = vmatprep.subr.mxu0 0.0
        %1151 = vmatpush2.msra.mxu0 0.0
        %1152 = vmatprep.subr.mxu0 0.0
        %1153 = vmatpush2.msra.mxu0 0.0
        %1154 = vmatprep.subr.mxu0 0.0
        %1155 = vmatpush2.msra.mxu0 0.0
        %1156 = vmatprep.subr.mxu0 0.0
        %1157 = vmatpush2.msra.mxu0 0.0
        %1158 = vmatprep.subr.mxu0 0.0
        %1159 = vmatpush2.msra.mxu0 0.0
        %1160 = vmatprep.subr.mxu0 0.0
        %1161 = vmatpush2.msra.mxu0 0.0
        %1162 = vmatprep.subr.mxu0 0.0
        %1163 = vmatpush2.msra.mxu0 0.0
        %1164 = vmatprep.subr.mxu0 0.0
        %1165 = vmatpush2.msra.mxu0 0.0
        %1166 = vmatprep.subr.mxu0 0.0
        %1167 = vmatpush2.msra.mxu0 0.0
        %1168 = vmatprep.subr.mxu0 0.0
        %1169 = vmatpush2.msra.mxu0 0.0
        %1170 = vmatprep.subr.mxu0 0.0
        %1171 = vmatpush2.msra.mxu0 0.0
        %1172 = vmatprep.subr.mxu0 0.0
        %1173 = vmatpush2.msra.mxu0 0.0
        %1174 = vmatprep.subr.mxu0 0.0
        %1175 = vmatpush2.msra.mxu0 0.0
        %1176 = vmatprep.subr.mxu0 0.0
        %1177 = vmatpush2.msra.mxu0 0.0
        %1178 = vmatprep.subr.mxu0 0.0
        %1179 = vmatpush2.msra.mxu0 0.0
        %1180 = vmatprep.mubr.f32.mxu0 0.0
        %1181 = vmatmul.mubr.f32.gmra.mxu0 %v1016
        %v1182 = vpop.f32.mrf.mxu0
        %v1183 = vadd.f32 0.0, %v1182
        %v1184 = vpop.f32.mrf.mxu0
        %1185 = vmatprep.mubr.f32.mxu0 0.0
        %1186 = vmatmul.mubr.f32.gmra.mxu0 %v1019
        %v1187 = vpop.f32.mrf.mxu0
        %v1188 = vadd.f32 0.0, %v1187
        %v1189 = vpop.f32.mrf.mxu0
        %1190 = vmatprep.mubr.f32.mxu0 0.0
        %1191 = vmatmul.mubr.f32.gmra.mxu0 %v1022
        %v1192 = vpop.f32.mrf.mxu0
        %v1193 = vadd.f32 0.0, %v1192
        %v1194 = vpop.f32.mrf.mxu0
        %1195 = vmatprep.mubr.f32.mxu0 0.0
        %1196 = vmatmul.mubr.f32.gmra.mxu0 %v1025
        %v1197 = vpop.f32.mrf.mxu0
        %v1198 = vadd.f32 0.0, %v1197
        %v1199 = vpop.f32.mrf.mxu0
        %1200 = vdwg.mxu0
        %1201 = vst [vmem:[%s338] sm:$0xff] %v1094
        %1202 = vst [vmem:[%s338 + $0x8] sm:$0xff] %v1096
        %1203 = vst.msk [vmem:[%s338 + $0x10] sm:$0xff] %vm759, %v1183
        %1204 = vst [vmem:[%s338 + $0x18] sm:$0xff] %v1100
        %1205 = vst [vmem:[%s338 + $0x20] sm:$0xff] %v1102
        %1206 = vst.msk [vmem:[%s338 + $0x28] sm:$0xff] %vm759, %v1188
        %1207 = vst [vmem:[%s338 + $0x30] sm:$0xff] %v1106
        %1208 = vst [vmem:[%s338 + $0x38] sm:$0xff] %v1108
        %1209 = vst.msk [vmem:[%s338 + $0x40] sm:$0xff] %vm759, %v1193
        %1210 = vst [vmem:[%s338 + $0x48] sm:$0xff] %v1112
        %1211 = vst [vmem:[%s338 + $0x50] sm:$0xff] %v1114
        %1212 = vst.msk [vmem:[%s338 + $0x58] sm:$0xff] %vm759, %v1198
        %v1213 = vsub.f32 %v1094, %v394
        %v1214 = vsub.f32 %v1096, %v395
        %v1215 = vsub.f32 %v1183, %v396
        %v1216 = vsub.f32 %v1100, %v397
        %v1217 = vsub.f32 %v1102, %v398
        %v1218 = vsub.f32 %v1188, %v399
        %v1219 = vsub.f32 %v1106, %v400
        %v1220 = vsub.f32 %v1108, %v401
        %v1221 = vsub.f32 %v1193, %v402
        %v1222 = vsub.f32 %v1112, %v403
        %v1223 = vsub.f32 %v1114, %v404
        %v1224 = vsub.f32 %v1198, %v405
        %v1225 = vmul.f32 %v1213, %v1213
        %v1226 = vmul.f32 %v1214, %v1214
        %v1227 = vmul.f32 %v1215, %v1215
        %v1228 = vmul.f32 %v1216, %v1216
        %v1229 = vmul.f32 %v1217, %v1217
        %v1230 = vmul.f32 %v1218, %v1218
        %v1231 = vmul.f32 %v1219, %v1219
        %v1232 = vmul.f32 %v1220, %v1220
        %v1233 = vmul.f32 %v1221, %v1221
        %v1234 = vmul.f32 %v1222, %v1222
        %v1235 = vmul.f32 %v1223, %v1223
        %v1236 = vmul.f32 %v1224, %v1224
        %v1237 = vld [vmem:[#allocation2] sm:$0xff]
        %v1238 = vld [vmem:[#allocation2 + $0x8] sm:$0xff]
        %v1239 = vld [vmem:[#allocation2 + $0x10] sm:$0xff]
        %v1240 = vld [vmem:[#allocation2 + $0x18] sm:$0xff]
        %v1241 = vadd.f32 %v1225, %v1226
        %v1242 = vsel %vm759, %v1227, 0.0
        %v1243 = vadd.f32 %v1241, %v1242
        %1244 = vadd.xlane.f32.xlu0 %v1243
        %v1245 = vpop.xlane.xlu0 %1244
        %v1246 = vadd.f32 %v1228, %v1229
        %v1247 = vsel %vm759, %v1230, 0.0
        %v1248 = vadd.f32 %v1246, %v1247
        %1249 = vadd.xlane.f32.xlu0 %v1248
        %v1250 = vpop.xlane.xlu0 %1249
        %v1251 = vadd.f32 %v1231, %v1232
        %v1252 = vsel %vm759, %v1233, 0.0
        %v1253 = vadd.f32 %v1251, %v1252
        %1254 = vadd.xlane.f32.xlu0 %v1253
        %v1255 = vpop.xlane.xlu0 %1254
        %v1256 = vadd.f32 %v1234, %v1235
        %v1257 = vsel %vm759, %v1236, 0.0
        %v1258 = vadd.f32 %v1256, %v1257
        %1259 = vadd.xlane.f32.xlu0 %v1258
        %v1260 = vpop.xlane.xlu0 %1259
        %v1261 = vadd.f32 %v1237, %v1245
        %v1262 = vadd.f32 %v1238, %v1250
        %v1263 = vadd.f32 %v1239, %v1255
        %v1264 = vadd.f32 %v1240, %v1260
        %vm1265 = vcmask 7168
        %1266 = vst.msk [vmem:[#allocation2] sm:$0xff] %vm1265, %v1261
        %1267 = vst.msk [vmem:[#allocation2 + $0x8] sm:$0xff] %vm1265, %v1262
        %1268 = vst.msk [vmem:[#allocation2 + $0x10] sm:$0xff] %vm1265, %v1263
        %1269 = vst.msk [vmem:[#allocation2 + $0x18] sm:$0xff] %vm1265, %v1264
        %v1270 = vld [vmem:[#allocation3] sm:$0xff]
        %v1271 = vld [vmem:[#allocation3 + $0x8] sm:$0xff]
        %v1272 = vld [vmem:[#allocation3 + $0x10] sm:$0xff]
        %v1273 = vld [vmem:[#allocation3 + $0x18] sm:$0xff]
        %v1274 = vld [vmem:[#allocation3 + $0x20] sm:$0xff]
        %v1275 = vld [vmem:[#allocation3 + $0x28] sm:$0xff]
        %v1276 = vld [vmem:[#allocation3 + $0x30] sm:$0xff]
        %v1277 = vld [vmem:[#allocation3 + $0x38] sm:$0xff]
        %v1278 = vadd.f32 %v991, %v992
        %v1279 = vsel %vm759, %v993, 0.0
        %v1280 = vadd.f32 %v1278, %v1279
        %1281 = vadd.xlane.f32.xlu0 %v1280
        %v1282 = vpop.xlane.xlu0 %1281
        %v1283 = vadd.f32 %v994, %v995
        %v1284 = vsel %vm759, %v996, 0.0
        %v1285 = vadd.f32 %v1283, %v1284
        %1286 = vadd.xlane.f32.xlu0 %v1285
        %v1287 = vpop.xlane.xlu0 %1286
        %v1288 = vadd.f32 %v997, %v998
        %v1289 = vsel %vm759, %v999, 0.0
        %v1290 = vadd.f32 %v1288, %v1289
        %1291 = vadd.xlane.f32.xlu0 %v1290
        %v1292 = vpop.xlane.xlu0 %1291
        %v1293 = vadd.f32 %v1000, %v1001
        %v1294 = vsel %vm759, %v1002, 0.0
        %v1295 = vadd.f32 %v1293, %v1294
        %1296 = vadd.xlane.f32.xlu0 %v1295
        %v1297 = vpop.xlane.xlu0 %1296
        %v1298 = vadd.f32 %v1003, %v1004
        %v1299 = vsel %vm759, %v1005, 0.0
        %v1300 = vadd.f32 %v1298, %v1299
        %1301 = vadd.xlane.f32.xlu0 %v1300
        %v1302 = vpop.xlane.xlu0 %1301
        %v1303 = vadd.f32 %v1006, %v1007
        %v1304 = vsel %vm759, %v1008, 0.0
        %v1305 = vadd.f32 %v1303, %v1304
        %1306 = vadd.xlane.f32.xlu0 %v1305
        %v1307 = vpop.xlane.xlu0 %1306
        %v1308 = vadd.f32 %v1009, %v1010
        %v1309 = vsel %vm759, %v1011, 0.0
        %v1310 = vadd.f32 %v1308, %v1309
        %1311 = vadd.xlane.f32.xlu0 %v1310
        %v1312 = vpop.xlane.xlu0 %1311
        %v1313 = vadd.f32 %v1012, %v1013
        %v1314 = vsel %vm759, %v1014, 0.0
        %v1315 = vadd.f32 %v1313, %v1314
        %1316 = vadd.xlane.f32.xlu0 %v1315
        %v1317 = vpop.xlane.xlu0 %1316
        %v1318 = vadd.f32 %v1270, %v1282
        %v1319 = vadd.f32 %v1271, %v1287
        %v1320 = vadd.f32 %v1272, %v1292
        %v1321 = vadd.f32 %v1273, %v1297
        %v1322 = vadd.f32 %v1274, %v1302
        %v1323 = vadd.f32 %v1275, %v1307
        %v1324 = vadd.f32 %v1276, %v1312
        %v1325 = vadd.f32 %v1277, %v1317
        %1326 = vst.msk [vmem:[#allocation3] sm:$0xff] %vm1265, %v1318
        %1327 = vst.msk [vmem:[#allocation3 + $0x8] sm:$0xff] %vm1265, %v1319
        %1328 = vst.msk [vmem:[#allocation3 + $0x10] sm:$0xff] %vm1265, %v1320
        %1329 = vst.msk [vmem:[#allocation3 + $0x18] sm:$0xff] %vm1265, %v1321
        %1330 = vst.msk [vmem:[#allocation3 + $0x20] sm:$0xff] %vm1265, %v1322
        %1331 = vst.msk [vmem:[#allocation3 + $0x28] sm:$0xff] %vm1265, %v1323
        %1332 = vst.msk [vmem:[#allocation3 + $0x30] sm:$0xff] %vm1265, %v1324
        %1333 = vst.msk [vmem:[#allocation3 + $0x38] sm:$0xff] %vm1265, %v1325
        // Predicated region
        $region45: #{tpu_custom_call.1} parent=35 // pred_check
          %p1334 = pneg %p378
        $region46: #{tpu_custom_call.1} parent=35 // pred_check_branch
          %1336 = sbr.rel (%p1334) target = $region48
        $region47: #{tpu_custom_call.1} parent=35 // pred_region
          %v1337 = vld [vmem:[#allocation2] sm:$0xff]
          %v1338 = vld [vmem:[#allocation2 + $0x8] sm:$0xff]
          %v1339 = vld [vmem:[#allocation2 + $0x10] sm:$0xff]
          %v1340 = vld [vmem:[#allocation2 + $0x18] sm:$0xff]
          %1341 = vadd.xlane.f32.xlu0 %v1337
          %v1342 = vpop.xlane.xlu0 %1341
          %1343 = vadd.xlane.f32.xlu0 %v1338
          %v1344 = vpop.xlane.xlu0 %1343
          %1345 = vadd.xlane.f32.xlu0 %v1339
          %v1346 = vpop.xlane.xlu0 %1345
          %1347 = vadd.xlane.f32.xlu0 %v1340
          %v1348 = vpop.xlane.xlu0 %1347
          %v1349 = vadd.f32 %v1342, %v1344
          %v1350 = vadd.f32 %v1349, %v1346
          %v1351 = vadd.f32 %v1350, %v1348
          %v1352 = vrot.slane %v1351, 4
          %v1353 = vadd.f32 %v1351, %v1352
          %v1354 = vrot.slane %v1353, 2
          %v1355 = vadd.f32 %v1353, %v1354
          %v1356 = vrot.slane %v1355, 1
          %v1357 = vadd.f32 %v1355, %v1356
          %vm1358 = vcmask 0
          %1359 = vst.msk [vmem:[%s369] sm:$0x1] %vm1358, %v1357
          %v1360 = vld [vmem:[#allocation3] sm:$0xff]
          %v1361 = vld [vmem:[#allocation3 + $0x8] sm:$0xff]
          %v1362 = vld [vmem:[#allocation3 + $0x10] sm:$0xff]
          %v1363 = vld [vmem:[#allocation3 + $0x18] sm:$0xff]
          %v1364 = vld [vmem:[#allocation3 + $0x20] sm:$0xff]
          %v1365 = vld [vmem:[#allocation3 + $0x28] sm:$0xff]
          %v1366 = vld [vmem:[#allocation3 + $0x30] sm:$0xff]
          %v1367 = vld [vmem:[#allocation3 + $0x38] sm:$0xff]
          %1368 = vadd.xlane.f32.xlu0 %v1360
          %v1369 = vpop.xlane.xlu0 %1368
          %1370 = vadd.xlane.f32.xlu0 %v1361
          %v1371 = vpop.xlane.xlu0 %1370
          %1372 = vadd.xlane.f32.xlu0 %v1362
          %v1373 = vpop.xlane.xlu0 %1372
          %1374 = vadd.xlane.f32.xlu0 %v1363
          %v1375 = vpop.xlane.xlu0 %1374
          %1376 = vadd.xlane.f32.xlu0 %v1364
          %v1377 = vpop.xlane.xlu0 %1376
          %1378 = vadd.xlane.f32.xlu0 %v1365
          %v1379 = vpop.xlane.xlu0 %1378
          %1380 = vadd.xlane.f32.xlu0 %v1366
          %v1381 = vpop.xlane.xlu0 %1380
          %1382 = vadd.xlane.f32.xlu0 %v1367
          %v1383 = vpop.xlane.xlu0 %1382
          %1384 = vst.msk [vmem:[%s376] sm:$0xff] %vm1265, %v1369
          %1385 = vst.msk [vmem:[%s376 + $0x8] sm:$0xff] %vm1265, %v1371
          %1386 = vst.msk [vmem:[%s376 + $0x10] sm:$0xff] %vm1265, %v1373
          %1387 = vst.msk [vmem:[%s376 + $0x18] sm:$0xff] %vm1265, %v1375
          %1388 = vst.msk [vmem:[%s376 + $0x20] sm:$0xff] %vm1265, %v1377
          %1389 = vst.msk [vmem:[%s376 + $0x28] sm:$0xff] %vm1265, %v1379
          %1390 = vst.msk [vmem:[%s376 + $0x30] sm:$0xff] %vm1265, %v1381
          %1391 = vst.msk [vmem:[%s376 + $0x38] sm:$0xff] %vm1265, %v1383
        $region48: #{tpu_custom_call.1} parent=35 // pred_fallthru
          _
        %s1392 = sand.u32 %s152, 1
        %s1393 = scalar_lea.sflag [#allocation6], %s1392
        %s1394 = sand.u32 %s152, 1
        %s1395 = smul.addr %s1394, 96
        %s1396 = scalar_lea.vmem [#allocation7], %s1395
        %s1397 = sand.u32 %s182, 1
        %s1398 = scalar_lea.sflag [#allocation9], %s1397
        %s1399 = sand.u32 %s182, 1
        %s1400 = smul.addr %s1399, 3
        %s1401 = scalar_lea.vmem [#allocation8], %s1400
        %s1402 = sadd.s32 %s33, %s34
        %p1403 = scmp.lt.s32.totalorder %s1402, 1
        %s1404 = scalar_select %p1403, %s1402, 1
        %s1405 = scalar_lea.vmem %s6, %s1404
        %s1406 = sadd.s32 %s33, %s34
        %p1407 = scmp.lt.s32.totalorder %s1406, 1
        %s1408 = scalar_select %p1407, %s1406, 1
        %s1409 = smul.addr %s1408, 8
        %s1410 = smul.addr %s1409, 8
        %s1411 = scalar_lea.vmem %s7, %s1410
        // Predicated region
        $region49: #{tpu_custom_call.1} parent=35 // pred_check
          %p1412 = pneg %p162
        $region50: #{tpu_custom_call.1} parent=35 // pred_check_branch
          %1414 = sbr.rel (%p1412) target = $region52
        $region51: #{tpu_custom_call.1} parent=35 // pred_region
          %s1415 = sadd.s32 %s34, %s35
          %s1416 = smul.u32 3, %s1415
          %s1418 = ssub.s32 1536, 1536
          %1419 = vsyncadd %s1393, %s1418
          %s1420 = smul.addr %s33, 12
          %s1421 = sadd.s32 %s1416, %s1420
          %s1422 = smul.addr %s1421, 128
          %s1423 = scalar_lea.hbm %s4, %s1422
          %s1424 = sshll.u32 %s1396, 4
          %s1425 = int_to_ptr.vmem [resolvable:$true] %s1424
          %1430 = dma.vmem_to_hbm [thread:$0]  %s1425, 1536, %s1423, %s1393, 384, 384, 24
        $region52: #{tpu_custom_call.1} parent=35 // pred_fallthru
          _
        // Predicated region
        $region53: #{tpu_custom_call.1} parent=35 // pred_check
          %p1431 = pneg %p192
        $region54: #{tpu_custom_call.1} parent=35 // pred_check_branch
          %1433 = sbr.rel (%p1431) target = $region56
        $region55: #{tpu_custom_call.1} parent=35 // pred_region
          %s1434 = sadd.s32 %s34, %s35
          %s1435 = smul.u32 3, %s1434
          %s1437 = ssub.s32 48, 48
          %1438 = vsyncadd %s1398, %s1437
          %s1439 = smul.addr %s33, 3
          %s1440 = sadd.s32 %s1435, %s1439
          %s1441 = smul.addr %s1440, 16
          %s1442 = scalar_lea.hbm %s5, %s1441
          %s1444 = sshll.u32 %s1401, 4
          %s1445 = int_to_ptr.vmem [resolvable:$true] %s1444
          %1447 = dma.vmem_to_hbm [thread:$0]  %s1445, 48, %s1442, %s1398
        $region56: #{tpu_custom_call.1} parent=35 // pred_fallthru
          _
        // Predicated region
        $region57: #{tpu_custom_call.1} parent=35 // pred_check
          %p1448 = pneg %p220
        $region58: #{tpu_custom_call.1} parent=35 // pred_check_branch
          %1450 = sbr.rel (%p1448) target = $region60
        $region59: #{tpu_custom_call.1} parent=35 // pred_region
          %s1451 = sadd.s32 %s33, %s34
        $region60: #{tpu_custom_call.1} parent=35 // pred_fallthru
          _
        // Predicated region
        $region61: #{tpu_custom_call.1} parent=35 // pred_check
          %p1452 = pneg %p248
        $region62: #{tpu_custom_call.1} parent=35 // pred_check_branch
          %1454 = sbr.rel (%p1452) target = $region64
        $region63: #{tpu_custom_call.1} parent=35 // pred_region
          %s1455 = sadd.s32 %s33, %s34
        $region64: #{tpu_custom_call.1} parent=35 // pred_fallthru
          _
      $region36: #{tpu_custom_call.1} parent=5 // pred_fallthru
        _
      %p1456 = scmp.le.s32.totalorder 2, %s23
      // Predicated region
      $region65: #{tpu_custom_call.1} parent=5 // pred_check
        %p1457 = pneg %p1456
      $region66: #{tpu_custom_call.1} parent=5 // pred_check_branch
        %1459 = sbr.rel (%p1457) target = $region68
      $region67: #{tpu_custom_call.1} parent=5 // pred_region
        %s1460 = ssub.s32 %s23, 2
        // Predicated region
        $region69: #{tpu_custom_call.1} parent=67 // pred_check
          %p1461 = pneg %p168
        $region70: #{tpu_custom_call.1} parent=67 // pred_check_branch
          %1463 = sbr.rel (%p1461) target = $region72
        $region71: #{tpu_custom_call.1} parent=67 // pred_region
          %s1464 = sand.u32 %s153, 1
          %s1465 = scalar_lea.sflag [#allocation6], %s1464
          %s1466 = sand.u32 %s153, 1
          %s1467 = smul.addr %s1466, 96
          %s1468 = scalar_lea.vmem [#allocation7], %s1467
          %1469 = dma.done %s1465, 1536
        $region72: #{tpu_custom_call.1} parent=67 // pred_fallthru
          _
        // Predicated region
        $region73: #{tpu_custom_call.1} parent=67 // pred_check
          %p1470 = pneg %p198
        $region74: #{tpu_custom_call.1} parent=67 // pred_check_branch
          %1472 = sbr.rel (%p1470) target = $region76
        $region75: #{tpu_custom_call.1} parent=67 // pred_region
          %s1473 = sand.u32 %s183, 1
          %s1474 = scalar_lea.sflag [#allocation9], %s1473
          %s1475 = sand.u32 %s183, 1
          %s1476 = smul.addr %s1475, 3
          %s1477 = scalar_lea.vmem [#allocation8], %s1476
          %1478 = dma.done %s1474, 48
        $region76: #{tpu_custom_call.1} parent=67 // pred_fallthru
          _
        // Predicated region
        $region77: #{tpu_custom_call.1} parent=67 // pred_check
          %p1479 = pneg %p226
        $region78: #{tpu_custom_call.1} parent=67 // pred_check_branch
          %1481 = sbr.rel (%p1479) target = $region80
        $region79: #{tpu_custom_call.1} parent=67 // pred_region
          %s1482 = sadd.s32 %s36, %s37
          %p1483 = scmp.lt.s32.totalorder %s1482, 1
          %s1484 = scalar_select %p1483, %s1482, 1
          %s1485 = scalar_lea.vmem %s6, %s1484
        $region80: #{tpu_custom_call.1} parent=67 // pred_fallthru
          _
        // Predicated region
        $region81: #{tpu_custom_call.1} parent=67 // pred_check
          %p1486 = pneg %p254
        $region82: #{tpu_custom_call.1} parent=67 // pred_check_branch
          %1488 = sbr.rel (%p1486) target = $region84
        $region83: #{tpu_custom_call.1} parent=67 // pred_region
          %s1489 = sadd.s32 %s36, %s37
          %p1490 = scmp.lt.s32.totalorder %s1489, 1
          %s1491 = scalar_select %p1490, %s1489, 1
          %s1492 = smul.addr %s1491, 8
          %s1493 = smul.addr %s1492, 8
          %s1494 = scalar_lea.vmem %s7, %s1493
        $region84: #{tpu_custom_call.1} parent=67 // pred_fallthru
          _
      $region68: #{tpu_custom_call.1} parent=5 // pred_fallthru
        _
    $region6: #{tpu_custom_call.1} parent=1 // loop_footer
      %s27 = sadd.s32 1, %s23
    $region7: #{tpu_custom_call.1} parent=1 // loop_footer_branch
      %22 = sbr.rel target = $region3
    $region8: #{tpu_custom_call.1} parent=1 // loop_exit
      _
    %1495 = vsyncpa [#allocation5], 1
    %s1496 = scalar_lea.sflag [#allocation5], 1
    %1497 = vsyncpa %s1496, 1
    %1498 = vsyncpa [#allocation6], 1
    %s1499 = scalar_lea.sflag [#allocation6], 1
    %1500 = vsyncpa %s1499, 1
    %1501 = vsyncpa [#allocation9], 1
    %s1502 = scalar_lea.sflag [#allocation9], 1
    %1503 = vsyncpa %s1502, 1

</llo_original>
